<compile_context>
chip_gen: v6e
topology: v6e:2x2x1
jax: 0.10.0
libtpu: 0.0.40
codegen_flags: <defaults>
</compile_context>

<pallas_src>
import numpy as np
import jax
import jax.numpy as jnp
from jax import lax
from jax.experimental import pallas as pl
from jax.experimental.pallas import tpu as pltpu

# ---------------- static model config (small, synthetic) ----------------
FILTERS = ((1, 8), (2, 8), (3, 16))       # (kernel_width, num_filters)
N_FILTERS = sum(n for _, n in FILTERS)    # 32
W_MAX = max(w for w, _ in FILTERS)        # 3
N_HIGHWAY = 1
WORD_DIM = 16                             # word_emb_layer.n_d
CHAR_DIM = 8                              # token_embedder.char_dim
PROJ_DIM = 32                             # encoder.projection_dim
EMB_DIM = WORD_DIM + N_FILTERS            # 48
ACTIVATION = "relu"                       # token_embedder.activation

F_PAD = 128                               # lane-dense padded feature width
MAX_TILE_N = 512                          # token rows per grid step (mult of 8)
T_CHUNK = 4                               # conv time positions per streamed chunk
NEG = -3.0e38                             # "minus infinity" for the time-max

WORD_VOCAB = 50
CHAR_VOCAB = 30

assert N_FILTERS + WORD_DIM <= F_PAD      # word emb fits in the padding lanes


def _act(x):
    if ACTIVATION == "relu":
        return jnp.maximum(x, 0.0)
    return jnp.tanh(x)


def _round_up(x, m):
    return ((x + m - 1) // m) * m


def _invalid_lane_ranges(t, L):
    """Lane ranges whose filter width makes output time `t` invalid (trace-time)."""
    ranges = []
    off = 0
    for (w, num) in FILTERS:
        if t > L - w:
            ranges.append((off, off + num))
        off += num
    merged = []
    for lo, hi in ranges:                 # merge adjacent ranges
        if merged and merged[-1][1] == lo:
            merged[-1] = (merged[-1][0], hi)
        else:
            merged.append((lo, hi))
    return merged


# ---------------------------- Pallas kernel ----------------------------
def conv_token_embedder_kernel(char_ref, word_ref, w_ref, b_ref, out_ref):
    """char_ref: [TN, L*C] bf16; word_ref: [TN, 128] bf16 (word emb at lanes
    [N_FILTERS : N_FILTERS+WORD_DIM)); w_ref: [R, L*128 + NH*256 + 128] bf16;
    b_ref: [1, 128 + NH*256 + 128] f32; out_ref: [TN, PROJ_DIM] f32."""
    TN = char_ref.shape[0]
    K = char_ref.shape[1]                 # L * CHAR_DIM
    L = K // CHAR_DIM

    char = char_ref[...]                  # [TN, K] bf16 (dense, lane=128 here)
    lane = lax.broadcasted_iota(jnp.int32, (1, F_PAD), 1)

    # ---- char CNN: block-Toeplitz matmuls, streamed running time-max ----
    feat = jnp.full((TN, F_PAD), NEG, jnp.float32)
    n_chunks = (L + T_CHUNK - 1) // T_CHUNK
    for tc in range(n_chunks):
        t0 = tc * T_CHUNK
        nt = min(T_CHUNK, L - t0)
        c0 = t0 * F_PAD
        c1 = (t0 + nt) * F_PAD
        # one K=L*C deep, nt*128 wide MXU matmul per chunk, f32 accumulation
        acc = jnp.dot(char, w_ref[0:K, c0:c1],
                      preferred_element_type=jnp.float32)      # [TN, nt*128]
        for j in range(nt):
            t = t0 + j
            col = acc[:, j * F_PAD:(j + 1) * F_PAD]            # lane-aligned slice
            for lo, hi in _invalid_lane_ranges(t, L):          # trace-time mask
                col = jnp.where((lane >= lo) & (lane < hi), NEG, col)
            feat = jnp.maximum(feat, col)
    # bias is time-independent: max(conv+b) == max(conv)+b
    feat = _act(feat + b_ref[:, 0:F_PAD])
    # Redundant under relu (max of zeros / NEG already yields 0 on padding
    # lanes) but REQUIRED if ACTIVATION == "tanh"; keep it.
    feat = jnp.where(lane < N_FILTERS, feat, 0.0)

    # ---- highway layers, fused (nonlinear | gate) 256-wide matmul ----
    hw_w0 = L * F_PAD
    hw_b0 = F_PAD
    x = feat
    for li in range(N_HIGHWAY):
        wc = hw_w0 + li * 2 * F_PAD
        bc = hw_b0 + li * 2 * F_PAD
        hw = jnp.dot(x.astype(jnp.bfloat16), w_ref[0:F_PAD, wc:wc + 2 * F_PAD],
                     preferred_element_type=jnp.float32) + b_ref[:, bc:bc + 2 * F_PAD]
        nonlin = _act(hw[:, :F_PAD])                           # vreg-boundary split
        gate = jax.nn.sigmoid(hw[:, F_PAD:])
        # padding lanes: gate=0.5, x=0, nonlin=0 -> stay exactly 0
        x = gate * x + (1.0 - gate) * nonlin

    # ---- projection: word emb folded in via disjoint-lane merge ----
    pj_w0 = hw_w0 + N_HIGHWAY * 2 * F_PAD
    pj_b0 = hw_b0 + N_HIGHWAY * 2 * F_PAD
    token = x.astype(jnp.bfloat16) + word_ref[...]             # lanes 0:32 char, 32:48 word
    out = jnp.dot(token, w_ref[0:F_PAD, pj_w0:pj_w0 + F_PAD],
                  preferred_element_type=jnp.float32) + b_ref[:, pj_b0:pj_b0 + F_PAD]
    out_ref[...] = out[:, :PROJ_DIM]


# ------------------------- param packing (host, once) -------------------------
def pack_params(params, L):
    """Fuse all weights into one bf16 slab + one f32 bias slab.

    Host-side numpy; call ONCE outside the jitted forward (review item).
    Layout (columns):
      w_all: [ Toeplitz conv : L*128 | highway (nonlin|gate) : NH*256 | proj : 128 ]
      b_all: [ conv bias : 128       | highway bias          : NH*256 | proj : 128 ]
    """
    assert L >= W_MAX, "char sequence shorter than the widest conv filter"
    K = L * CHAR_DIM
    R = max(K, F_PAD)
    w_all = np.zeros((R, L * F_PAD + N_HIGHWAY * 2 * F_PAD + F_PAD), np.float32)
    b_all = np.zeros((1, F_PAD + N_HIGHWAY * 2 * F_PAD + F_PAD), np.float32)

    # block-Toeplitz char-CNN weight: only valid output times are filled;
    # invalid (t, filter) positions are masked to NEG in-kernel before the max.
    off = 0
    for fi, (w, num) in enumerate(FILTERS):
        Wf = np.asarray(params[f"conv_w_{fi}"], np.float32)    # [w, C, num]
        b_all[0, off:off + num] = np.asarray(params[f"conv_b_{fi}"], np.float32).reshape(-1)
        for t in range(L - w + 1):
            for k in range(w):
                r0 = (t + k) * CHAR_DIM
                c0 = t * F_PAD + off
                w_all[r0:r0 + CHAR_DIM, c0:c0 + num] = Wf[k]
        off += num

    # fused highway weights: nonlinear part -> lanes [0,128), gate -> [128,256)
    for li in range(N_HIGHWAY):
        whw = np.asarray(params[f"hw_w_{li}"], np.float32)     # [32, 64]
        bh = np.asarray(params[f"hw_b_{li}"], np.float32).reshape(-1)
        c0 = L * F_PAD + li * 2 * F_PAD
        w_all[:N_FILTERS, c0:c0 + N_FILTERS] = whw[:, :N_FILTERS]
        w_all[:N_FILTERS, c0 + F_PAD:c0 + F_PAD + N_FILTERS] = whw[:, N_FILTERS:]
        b0 = F_PAD + li * 2 * F_PAD
        b_all[0, b0:b0 + N_FILTERS] = bh[:N_FILTERS]
        b_all[0, b0 + F_PAD:b0 + F_PAD + N_FILTERS] = bh[N_FILTERS:]

    # projection, word rows folded in: token lanes [0:32)=char, [32:48)=word
    pw = np.asarray(params["proj_w"], np.float32)              # [48, 32]
    c0 = L * F_PAD + N_HIGHWAY * 2 * F_PAD
    w_all[:N_FILTERS, c0:c0 + PROJ_DIM] = pw[WORD_DIM:]
    w_all[N_FILTERS:N_FILTERS + WORD_DIM, c0:c0 + PROJ_DIM] = pw[:WORD_DIM]
    b0 = F_PAD + N_HIGHWAY * 2 * F_PAD
    b_all[0, b0:b0 + PROJ_DIM] = np.asarray(params["proj_b"], np.float32).reshape(-1)

    return {"w_all": jnp.asarray(w_all, jnp.bfloat16),
            "b_all": jnp.asarray(b_all, jnp.float32)}


# ------------------------------ wrapper ------------------------------
@jax.jit
def conv_token_embedder(word_emb, char_emb, packed):
    """word_emb: [B, S, WORD_DIM] f32; char_emb: [B, S, L, CHAR_DIM] f32;
    packed: output of pack_params (pre-packed once, outside this jit)."""
    B, S, _ = word_emb.shape
    L = char_emb.shape[2]
    N = B * S
    K = L * CHAR_DIM
    assert L >= W_MAX, "char sequence shorter than the widest conv filter"
    assert packed["w_all"].shape[1] == L * F_PAD + N_HIGHWAY * 2 * F_PAD + F_PAD, \
        "packed params were built for a different char length L"

    # >=2 grid steps whenever possible (v7x second TensorCore), big tiles otherwise
    TN = min(MAX_TILE_N, _round_up(max(-(-N // 2), 1), 8))
    N_pad = _round_up(N, TN)

    # dense 128-lane char slab; word emb pre-placed at lanes [N_FILTERS:N_FILTERS+WORD_DIM)
    char = jnp.pad(char_emb.reshape(N, K).astype(jnp.bfloat16), ((0, N_pad - N), (0, 0)))
    word = jnp.pad(word_emb.reshape(N, WORD_DIM).astype(jnp.bfloat16),
                   ((0, N_pad - N), (N_FILTERS, F_PAD - N_FILTERS - WORD_DIM)))

    out = pl.pallas_call(
        conv_token_embedder_kernel,
        out_shape=jax.ShapeDtypeStruct((N_pad, PROJ_DIM), jnp.float32),
        grid=(N_pad // TN,),
        in_specs=[
            pl.BlockSpec((TN, K), lambda i: (i, 0)),
            pl.BlockSpec((TN, F_PAD), lambda i: (i, 0)),
            pl.BlockSpec(packed["w_all"].shape, lambda i: (0, 0)),
            pl.BlockSpec(packed["b_all"].shape, lambda i: (0, 0)),
        ],
        out_specs=pl.BlockSpec((TN, PROJ_DIM), lambda i: (i, 0)),
        compiler_params=pltpu.CompilerParams(
            dimension_semantics=("parallel",),
            vmem_limit_bytes=16 * 1024 * 1024),
    )(char, word, packed["w_all"], packed["b_all"])
    return out[:N].reshape(B, S, PROJ_DIM)


# -------------------------- pure-JAX reference --------------------------
def reference(word_emb, char_emb, params):
    B, S, _ = word_emb.shape
    L = char_emb.shape[2]
    N = B * S
    char = char_emb.reshape(N, L, CHAR_DIM)
    feats = []
    for fi, (w, num) in enumerate(FILTERS):
        Lp = L - w + 1
        W = params[f"conv_w_{fi}"]
        acc = jnp.zeros((N, Lp, num), jnp.float32)
        for k in range(w):
            acc = acc + jnp.einsum("nlc,co->nlo", char[:, k:k + Lp, :], W[k])
        acc = acc + params[f"conv_b_{fi}"].reshape(1, 1, num)
        feats.append(_act(jnp.max(acc, axis=1)))
    x = jnp.concatenate(feats, axis=-1)
    for li in range(N_HIGHWAY):
        proj = x @ params[f"hw_w_{li}"] + params[f"hw_b_{li}"]
        nonlin = _act(proj[:, :N_FILTERS])
        gate = jax.nn.sigmoid(proj[:, N_FILTERS:])
        x = gate * x + (1.0 - gate) * nonlin
    token = jnp.concatenate([word_emb.reshape(N, WORD_DIM), x], axis=-1)
    out = token @ params["proj_w"] + params["proj_b"]
    return out.reshape(B, S, PROJ_DIM)


# ------------------------------- params -------------------------------
def init_params(key):
    params = {}
    n_keys = 2 * len(FILTERS) + 2 * N_HIGHWAY + 2
    keys = iter(jax.random.split(key, n_keys))
    for fi, (w, num) in enumerate(FILTERS):
        params[f"conv_w_{fi}"] = 0.1 * jax.random.normal(
            next(keys), (w, CHAR_DIM, num), jnp.float32)
        params[f"conv_b_{fi}"] = 0.1 * jax.random.normal(
            next(keys), (1, num), jnp.float32)
    for li in range(N_HIGHWAY):
        params[f"hw_w_{li}"] = 0.1 * jax.random.normal(
            next(keys), (N_FILTERS, 2 * N_FILTERS), jnp.float32)
        params[f"hw_b_{li}"] = 0.1 * jax.random.normal(
            next(keys), (1, 2 * N_FILTERS), jnp.float32)
    params["proj_w"] = 0.1 * jax.random.normal(
        next(keys), (EMB_DIM, PROJ_DIM), jnp.float32)
    params["proj_b"] = 0.1 * jax.random.normal(
        next(keys), (1, PROJ_DIM), jnp.float32)
    return params


# -------------------------------- main --------------------------------
if __name__ == "__main__":
    B, S, L = 2, 8, 16  # batch, seq_len, max chars per token
    key = jax.random.PRNGKey(0)
    k_ids, k_cids, k_wtab, k_ctab, k_par = jax.random.split(key, 5)

    # token / char ids and embedding tables (lookup = plain-JAX glue)
    word_inp = jax.random.randint(k_ids, (B, S), 0, WORD_VOCAB, jnp.int32)
    chars_inp = jax.random.randint(k_cids, (B, S, L), 0, CHAR_VOCAB, jnp.int32)
    word_table = 0.1 * jax.random.normal(k_wtab, (WORD_VOCAB, WORD_DIM), jnp.float32)
    char_table = 0.1 * jax.random.normal(k_ctab, (CHAR_VOCAB, CHAR_DIM), jnp.float32)
    params = init_params(k_par)

    word_emb = jnp.take(word_table, word_inp, axis=0)      # [B, S, WORD_DIM]
    char_emb = jnp.take(char_table, chars_inp, axis=0)     # [B, S, L, CHAR_DIM]

    # weight packing hoisted out of the jitted forward (runs once)
    packed = pack_params(params, L)

    out = conv_token_embedder(word_emb, char_emb, packed)
    out = jax.block_until_ready(out)

    ref = reference(word_emb, char_emb, params)
    assert out.shape == (B, S, PROJ_DIM)
    # bf16 matmul operands vs f32 reference -> loosened tolerance (documented).
    assert jnp.allclose(out, ref, atol=2e-2, rtol=2e-2), \
        f"max abs diff {jnp.max(jnp.abs(out - ref))}"
    print("KERNEL_OK")
</pallas_src>

<mosaic_0001>
module attributes {stable_mosaic.version = 11 : i64} {
  func.func @conv_token_embedder_kernel(%arg0: i32, %arg1: memref<8x128xbf16, #tpu.memory_space<vmem>>, %arg2: memref<8x128xbf16, #tpu.memory_space<vmem>>, %arg3: memref<128x2432xbf16, #tpu.memory_space<vmem>>, %arg4: memref<1x512xf32, #tpu.memory_space<vmem>>, %arg5: memref<8x32xf32, #tpu.memory_space<vmem>>) attributes {dimension_semantics = [#tpu.dimension_semantics<parallel>], iteration_bounds = array<i64: 2>, scalar_prefetch = 0 : i64, scratch_operands = 0 : i64, tpu.core_type = #tpu.core_type<tc>, window_params = [{transform_indices = @transform_0, window_bounds = array<i64: 8, 128>}, {transform_indices = @transform_1, window_bounds = array<i64: 8, 128>}, {pipeline_mode = #tpu.pipeline_mode<synchronous>, transform_indices = @transform_2, window_bounds = array<i64: 128, 2432>}, {pipeline_mode = #tpu.pipeline_mode<synchronous>, transform_indices = @transform_3, window_bounds = array<i64: 1, 512>}, {transform_indices = @transform_4, window_bounds = array<i64: 8, 32>}]} {
    %c0 = arith.constant 0 : index
    %c0_0 = arith.constant 0 : index
    %0 = vector.load %arg1[%c0, %c0_0] : memref<8x128xbf16, #tpu.memory_space<vmem>>, vector<8x128xbf16>
    %1 = tpu.iota {dimensions = array<i32: 1>} : vector<1x128xi32>
    %cst = arith.constant -3.000000e+38 : f32
    %2 = vector.broadcast %cst : f32 to vector<8x128xf32>
    %c0_1 = arith.constant 0 : index
    %c0_2 = arith.constant 0 : index
    %3 = vector.load %arg3[%c0_1, %c0_2] : memref<128x2432xbf16, #tpu.memory_space<vmem>>, vector<128x512xbf16>
    %cst_3 = arith.constant dense<0.000000e+00> : vector<8x512xf32>
    %4 = tpu.matmul %0, %3, %cst_3 {dimension_numbers = #tpu.dot_dimension_numbers<[1], [0], [0], [1], [0, 0, 1, 1], [], []>} : vector<8x128xbf16>, vector<128x512xbf16>, vector<8x512xf32> -> vector<8x512xf32>
    %5 = vector.extract_strided_slice %4 {offsets = [0, 0], sizes = [8, 128], strides = [1, 1]} : vector<8x512xf32> to vector<8x128xf32>
    %6 = arith.maximumf %2, %5 : vector<8x128xf32>
    %7 = vector.extract_strided_slice %4 {offsets = [0, 128], sizes = [8, 128], strides = [1, 1]} : vector<8x512xf32> to vector<8x128xf32>
    %8 = arith.maximumf %6, %7 : vector<8x128xf32>
    %9 = vector.extract_strided_slice %4 {offsets = [0, 256], sizes = [8, 128], strides = [1, 1]} : vector<8x512xf32> to vector<8x128xf32>
    %10 = arith.maximumf %8, %9 : vector<8x128xf32>
    %11 = vector.extract_strided_slice %4 {offsets = [0, 384], sizes = [8, 128], strides = [1, 1]} : vector<8x512xf32> to vector<8x128xf32>
    %12 = arith.maximumf %10, %11 : vector<8x128xf32>
    %c0_4 = arith.constant 0 : index
    %c512 = arith.constant 512 : index
    %13 = vector.load %arg3[%c0_4, %c512] : memref<128x2432xbf16, #tpu.memory_space<vmem>>, vector<128x512xbf16>
    %cst_5 = arith.constant dense<0.000000e+00> : vector<8x512xf32>
    %14 = tpu.matmul %0, %13, %cst_5 {dimension_numbers = #tpu.dot_dimension_numbers<[1], [0], [0], [1], [0, 0, 1, 1], [], []>} : vector<8x128xbf16>, vector<128x512xbf16>, vector<8x512xf32> -> vector<8x512xf32>
    %15 = vector.extract_strided_slice %14 {offsets = [0, 0], sizes = [8, 128], strides = [1, 1]} : vector<8x512xf32> to vector<8x128xf32>
    %16 = arith.maximumf %12, %15 : vector<8x128xf32>
    %17 = vector.extract_strided_slice %14 {offsets = [0, 128], sizes = [8, 128], strides = [1, 1]} : vector<8x512xf32> to vector<8x128xf32>
    %18 = arith.maximumf %16, %17 : vector<8x128xf32>
    %19 = vector.extract_strided_slice %14 {offsets = [0, 256], sizes = [8, 128], strides = [1, 1]} : vector<8x512xf32> to vector<8x128xf32>
    %20 = arith.maximumf %18, %19 : vector<8x128xf32>
    %21 = vector.extract_strided_slice %14 {offsets = [0, 384], sizes = [8, 128], strides = [1, 1]} : vector<8x512xf32> to vector<8x128xf32>
    %22 = arith.maximumf %20, %21 : vector<8x128xf32>
    %c0_6 = arith.constant 0 : index
    %c1024 = arith.constant 1024 : index
    %23 = vector.load %arg3[%c0_6, %c1024] : memref<128x2432xbf16, #tpu.memory_space<vmem>>, vector<128x512xbf16>
    %cst_7 = arith.constant dense<0.000000e+00> : vector<8x512xf32>
    %24 = tpu.matmul %0, %23, %cst_7 {dimension_numbers = #tpu.dot_dimension_numbers<[1], [0], [0], [1], [0, 0, 1, 1], [], []>} : vector<8x128xbf16>, vector<128x512xbf16>, vector<8x512xf32> -> vector<8x512xf32>
    %25 = vector.extract_strided_slice %24 {offsets = [0, 0], sizes = [8, 128], strides = [1, 1]} : vector<8x512xf32> to vector<8x128xf32>
    %26 = arith.maximumf %22, %25 : vector<8x128xf32>
    %27 = vector.extract_strided_slice %24 {offsets = [0, 128], sizes = [8, 128], strides = [1, 1]} : vector<8x512xf32> to vector<8x128xf32>
    %28 = arith.maximumf %26, %27 : vector<8x128xf32>
    %29 = vector.extract_strided_slice %24 {offsets = [0, 256], sizes = [8, 128], strides = [1, 1]} : vector<8x512xf32> to vector<8x128xf32>
    %30 = arith.maximumf %28, %29 : vector<8x128xf32>
    %31 = vector.extract_strided_slice %24 {offsets = [0, 384], sizes = [8, 128], strides = [1, 1]} : vector<8x512xf32> to vector<8x128xf32>
    %32 = arith.maximumf %30, %31 : vector<8x128xf32>
    %c0_8 = arith.constant 0 : index
    %c1536 = arith.constant 1536 : index
    %33 = vector.load %arg3[%c0_8, %c1536] : memref<128x2432xbf16, #tpu.memory_space<vmem>>, vector<128x512xbf16>
    %cst_9 = arith.constant dense<0.000000e+00> : vector<8x512xf32>
    %34 = tpu.matmul %0, %33, %cst_9 {dimension_numbers = #tpu.dot_dimension_numbers<[1], [0], [0], [1], [0, 0, 1, 1], [], []>} : vector<8x128xbf16>, vector<128x512xbf16>, vector<8x512xf32> -> vector<8x512xf32>
    %35 = vector.extract_strided_slice %34 {offsets = [0, 0], sizes = [8, 128], strides = [1, 1]} : vector<8x512xf32> to vector<8x128xf32>
    %36 = arith.maximumf %32, %35 : vector<8x128xf32>
    %37 = vector.extract_strided_slice %34 {offsets = [0, 128], sizes = [8, 128], strides = [1, 1]} : vector<8x512xf32> to vector<8x128xf32>
    %38 = arith.maximumf %36, %37 : vector<8x128xf32>
    %39 = vector.extract_strided_slice %34 {offsets = [0, 256], sizes = [8, 128], strides = [1, 1]} : vector<8x512xf32> to vector<8x128xf32>
    %c16_i32 = arith.constant 16 : i32
    %40 = vector.broadcast %c16_i32 : i32 to vector<1x128xi32>
    %41 = arith.cmpi sge, %1, %40 : vector<1x128xi32>
    %c32_i32 = arith.constant 32 : i32
    %42 = vector.broadcast %c32_i32 : i32 to vector<1x128xi32>
    %43 = arith.cmpi slt, %1, %42 : vector<1x128xi32>
    %44 = arith.andi %41, %43 : vector<1x128xi1>
    %cst_10 = arith.constant -3.000000e+38 : f32
    %45 = vector.shape_cast %44 : vector<1x128xi1> to vector<1x128xi1>
    %46 = vector.broadcast %45 : vector<1x128xi1> to vector<8x128xi1>
    %47 = vector.broadcast %cst_10 : f32 to vector<8x128xf32>
    %48 = arith.select %46, %47, %39 : vector<8x128xi1>, vector<8x128xf32>
    %49 = arith.maximumf %38, %48 : vector<8x128xf32>
    %50 = vector.extract_strided_slice %34 {offsets = [0, 384], sizes = [8, 128], strides = [1, 1]} : vector<8x512xf32> to vector<8x128xf32>
    %c8_i32 = arith.constant 8 : i32
    %51 = vector.broadcast %c8_i32 : i32 to vector<1x128xi32>
    %52 = arith.cmpi sge, %1, %51 : vector<1x128xi32>
    %c32_i32_11 = arith.constant 32 : i32
    %53 = vector.broadcast %c32_i32_11 : i32 to vector<1x128xi32>
    %54 = arith.cmpi slt, %1, %53 : vector<1x128xi32>
    %55 = arith.andi %52, %54 : vector<1x128xi1>
    %cst_12 = arith.constant -3.000000e+38 : f32
    %56 = vector.shape_cast %55 : vector<1x128xi1> to vector<1x128xi1>
    %57 = vector.broadcast %56 : vector<1x128xi1> to vector<8x128xi1>
    %58 = vector.broadcast %cst_12 : f32 to vector<8x128xf32>
    %59 = arith.select %57, %58, %50 : vector<8x128xi1>, vector<8x128xf32>
    %60 = arith.maximumf %49, %59 : vector<8x128xf32>
    %c0_13 = arith.constant 0 : index
    %c0_14 = arith.constant 0 : index
    %61 = vector.load %arg4[%c0_13, %c0_14] : memref<1x512xf32, #tpu.memory_space<vmem>>, vector<1x128xf32>
    %62 = vector.broadcast %61 : vector<1x128xf32> to vector<8x128xf32>
    %63 = arith.addf %60, %62 : vector<8x128xf32>
    %cst_15 = arith.constant 0.000000e+00 : f32
    %64 = vector.broadcast %cst_15 : f32 to vector<8x128xf32>
    %65 = arith.maximumf %63, %64 : vector<8x128xf32>
    %c32_i32_16 = arith.constant 32 : i32
    %66 = vector.broadcast %c32_i32_16 : i32 to vector<1x128xi32>
    %67 = arith.cmpi slt, %1, %66 : vector<1x128xi32>
    %cst_17 = arith.constant 0.000000e+00 : f32
    %68 = vector.shape_cast %67 : vector<1x128xi1> to vector<1x128xi1>
    %69 = vector.broadcast %68 : vector<1x128xi1> to vector<8x128xi1>
    %70 = vector.broadcast %cst_17 : f32 to vector<8x128xf32>
    %71 = arith.select %69, %65, %70 : vector<8x128xi1>, vector<8x128xf32>
    %72 = arith.truncf %71 : vector<8x128xf32> to vector<8x128xbf16>
    %c0_18 = arith.constant 0 : index
    %c2048 = arith.constant 2048 : index
    %73 = vector.load %arg3[%c0_18, %c2048] : memref<128x2432xbf16, #tpu.memory_space<vmem>>, vector<128x256xbf16>
    %cst_19 = arith.constant dense<0.000000e+00> : vector<8x256xf32>
    %74 = tpu.matmul %72, %73, %cst_19 {dimension_numbers = #tpu.dot_dimension_numbers<[1], [0], [0], [1], [0, 0, 1, 1], [], []>} : vector<8x128xbf16>, vector<128x256xbf16>, vector<8x256xf32> -> vector<8x256xf32>
    %c0_20 = arith.constant 0 : index
    %c128 = arith.constant 128 : index
    %75 = vector.load %arg4[%c0_20, %c128] : memref<1x512xf32, #tpu.memory_space<vmem>>, vector<1x256xf32>
    %76 = vector.broadcast %75 : vector<1x256xf32> to vector<8x256xf32>
    %77 = arith.addf %74, %76 : vector<8x256xf32>
    %78 = vector.extract_strided_slice %77 {offsets = [0, 0], sizes = [8, 128], strides = [1, 1]} : vector<8x256xf32> to vector<8x128xf32>
    %cst_21 = arith.constant 0.000000e+00 : f32
    %79 = vector.broadcast %cst_21 : f32 to vector<8x128xf32>
    %80 = arith.maximumf %78, %79 : vector<8x128xf32>
    %81 = vector.extract_strided_slice %77 {offsets = [0, 128], sizes = [8, 128], strides = [1, 1]} : vector<8x256xf32> to vector<8x128xf32>
    %82 = arith.negf %81 : vector<8x128xf32>
    %83 = math.exp %82 : vector<8x128xf32>
    %cst_22 = arith.constant 1.000000e+00 : f32
    %84 = vector.broadcast %cst_22 : f32 to vector<8x128xf32>
    %85 = arith.addf %84, %83 : vector<8x128xf32>
    %86 = arith.divf %84, %85 : vector<8x128xf32>
    %87 = arith.mulf %86, %71 : vector<8x128xf32>
    %cst_23 = arith.constant 1.000000e+00 : f32
    %88 = vector.broadcast %cst_23 : f32 to vector<8x128xf32>
    %89 = arith.subf %88, %86 : vector<8x128xf32>
    %90 = arith.mulf %89, %80 : vector<8x128xf32>
    %91 = arith.addf %87, %90 : vector<8x128xf32>
    %92 = arith.truncf %91 : vector<8x128xf32> to vector<8x128xbf16>
    %c0_24 = arith.constant 0 : index
    %c0_25 = arith.constant 0 : index
    %93 = vector.load %arg2[%c0_24, %c0_25] : memref<8x128xbf16, #tpu.memory_space<vmem>>, vector<8x128xbf16>
    %94 = arith.addf %92, %93 : vector<8x128xbf16>
    %c0_26 = arith.constant 0 : index
    %c2304 = arith.constant 2304 : index
    %95 = vector.load %arg3[%c0_26, %c2304] : memref<128x2432xbf16, #tpu.memory_space<vmem>>, vector<128x128xbf16>
    %cst_27 = arith.constant dense<0.000000e+00> : vector<8x128xf32>
    %96 = tpu.matmul %94, %95, %cst_27 {dimension_numbers = #tpu.dot_dimension_numbers<[1], [0], [0], [1], [0, 0, 1, 1], [], []>} : vector<8x128xbf16>, vector<128x128xbf16>, vector<8x128xf32> -> vector<8x128xf32>
    %c0_28 = arith.constant 0 : index
    %c384 = arith.constant 384 : index
    %97 = vector.load %arg4[%c0_28, %c384] : memref<1x512xf32, #tpu.memory_space<vmem>>, vector<1x128xf32>
    %98 = vector.broadcast %97 : vector<1x128xf32> to vector<8x128xf32>
    %99 = arith.addf %96, %98 : vector<8x128xf32>
    %100 = vector.extract_strided_slice %99 {offsets = [0, 0], sizes = [8, 32], strides = [1, 1]} : vector<8x128xf32> to vector<8x32xf32>
    %c0_29 = arith.constant 0 : index
    %c0_30 = arith.constant 0 : index
    %101 = vector.load %arg5[%c0_29, %c0_30] : memref<8x32xf32, #tpu.memory_space<vmem>>, vector<8x32xf32>
    tpu.vector_store %arg5[%c0_29, %c0_30], %100 {strides = array<i32>} : memref<8x32xf32, #tpu.memory_space<vmem>>, vector<8x32xf32>,
    return
  }
  func.func @transform_0(%arg0: i32) -> (i32, i32) {
    %c0_i32 = arith.constant 0 : i32
    %c0_i32_0 = arith.constant 0 : i32
    return %arg0, %c0_i32 : i32, i32
  }
  func.func @transform_1(%arg0: i32) -> (i32, i32) {
    %c0_i32 = arith.constant 0 : i32
    %c0_i32_0 = arith.constant 0 : i32
    return %arg0, %c0_i32 : i32, i32
  }
  func.func @transform_2(%arg0: i32) -> (i32, i32) {
    %c0_i32 = arith.constant 0 : i32
    %c0_i32_0 = arith.constant 0 : i32
    %c0_i32_1 = arith.constant 0 : i32
    return %c0_i32, %c0_i32_0 : i32, i32
  }
  func.func @transform_3(%arg0: i32) -> (i32, i32) {
    %c0_i32 = arith.constant 0 : i32
    %c0_i32_0 = arith.constant 0 : i32
    %c0_i32_1 = arith.constant 0 : i32
    return %c0_i32, %c0_i32_0 : i32, i32
  }
  func.func @transform_4(%arg0: i32) -> (i32, i32) {
    %c0_i32 = arith.constant 0 : i32
    %c0_i32_0 = arith.constant 0 : i32
    return %arg0, %c0_i32 : i32, i32
  }
}

</mosaic_0001>

<llo_original>
// kernel: conv_token_embedder.1
$region0: #{conv_token_embedder.1}
  #allocation0 [shape = 'u32[]', space=smem, size = 0x4, offset = 0x4, fixed_abs, tag = 'smem constant byte address 0x4 - core index']
  #allocation1 [shape = 'u32[144,128]{1,0:T(1,128)}', space=vmem, size = 0x12000, scoped, tag = 'internal scratch']
  %s0 = inlined_call_operand.vmem [shape: bf16[16,128], index: 0, kind: input, shape index: {}]
  %s1 = inlined_call_operand.vmem [shape: bf16[16,128], index: 1, kind: input, shape index: {}]
  %s2 = inlined_call_operand.hbm [shape: bf16[128,2432], index: 2, kind: input, shape index: {}]
  %s3 = inlined_call_operand.vmem [shape: f32[1,512], index: 3, kind: input, shape index: {}]
  %s4 = inlined_call_operand.hbm [shape: f32[16,32], index: 4, kind: output, shape index: {}]
  %s5 = sld [smem:[#allocation0]]
  $region53: #{conv_token_embedder.1} parent=0
    _
  %s7 = ssub.s32 1, %s5
  %s8 = scalar_select 0, %s7, %s5
  $region1: #{conv_token_embedder.1} parent=0
    #allocation2 [shape = 'u8[622592]{0}', space=vmem, size = 0x98000, scoped, tag = 'input window, operand 2, single buffered']
    #allocation3 [shape = 's32[2]{0}', space=sflag, size = 0x8, scoped, tag = 'scoped memory for conv_token_embedder.1']
    #allocation4 [shape = 's32[2]{0}', space=sflag, size = 0x8, scoped, tag = 'scoped memory for conv_token_embedder.1']
    #allocation5 [shape = 'u8[8192]{0}', space=vmem, size = 0x2000, scoped, tag = 'output window, operand 0']
    %9 = vsyncpa [#allocation3], 0
    %10 = vsyncpa [#allocation4], 0
    %s11 = scalar_lea.sflag [#allocation4], 1
    %12 = vsyncpa %s11, 0
    loop: start=0, step=1, limit=4
    $region2: #{conv_token_embedder.1} parent=1 // loop_pre_header
      _
    $region3: #{conv_token_embedder.1} parent=1 // loop_header
      %s14 = sphi 0, %s18
      %p15 = scmp.ge.s32.totalorder %s14, 4
      %s24 = sphi 0, %s26
      %s27 = sphi 0, %s24
      %s28 = sphi 0, %s27
      %s44 = sphi 0, %s28
      %s50 = sphi 0, %s52
      %s53 = sphi 0, %s50
      %s54 = sphi 0, %s53
      %s70 = sphi 0, %s54
      %s74 = sphi 0, %s74
      %s76 = sphi 0, %s74
      %s77 = sphi 0, %s76
      %s91 = sphi 0, %s77
      %s95 = sphi 0, %s95
      %s97 = sphi 0, %s95
      %s98 = sphi 0, %s97
      %s112 = sphi 0, %s98
      %s118 = sphi 0, %s120
      %s121 = sphi 0, %s118
      %s122 = sphi 0, %s121
      %s138 = sphi 0, %s122
    $region4: #{conv_token_embedder.1} parent=1 // loop_header_branch
      %17 = sbr.rel (%p15) target = $region8
    $region5: #{conv_token_embedder.1} parent=1 // loop_body
      %s19 = ssub.s32 %s14, 1
      %s20 = ssub.s32 %s14, 2
      %s21 = sadd.s32 %s14, 1
      %s22 = ssub.s32 %s14, %s21
      %p23 = scmp.eq.s32.totalorder %s22, 0
      %s25 = sadd.s32 %s24, 1
      %s26 = scalar_select %p23, %s24, %s25
      %p29 = pneg %p23
      %p30 = scmp.eq.s32.totalorder %s14, 1
      %p31 = por %p29, %p30
      %p32 = scmp.ne.s32.totalorder %s24, %s27
      %p33 = scmp.eq.s32.totalorder %s14, 0
      %p34 = por %p32, %p33
      %p35 = scmp.ne.s32.totalorder %s24, %s27
      %p36 = scmp.eq.s32.totalorder %s19, 1
      %p37 = por %p35, %p36
      %p38 = scmp.ne.s32.totalorder %s27, %s28
      %p39 = scmp.eq.s32.totalorder %s19, 0
      %p40 = por %p38, %p39
      %p41 = scmp.ne.s32.totalorder %s27, %s28
      %p42 = scmp.eq.s32.totalorder %s20, 1
      %p43 = por %p41, %p42
      %p45 = scmp.ne.s32.totalorder %s28, %s44
      %p46 = scmp.eq.s32.totalorder %s20, 0
      %p47 = por %p45, %p46
      %s48 = ssub.s32 %s14, %s21
      %p49 = scmp.eq.s32.totalorder %s48, 0
      %s51 = sadd.s32 %s50, 1
      %s52 = scalar_select %p49, %s50, %s51
      %p55 = pneg %p49
      %p56 = scmp.eq.s32.totalorder %s14, 1
      %p57 = por %p55, %p56
      %p58 = scmp.ne.s32.totalorder %s50, %s53
      %p59 = scmp.eq.s32.totalorder %s14, 0
      %p60 = por %p58, %p59
      %p61 = scmp.ne.s32.totalorder %s50, %s53
      %p62 = scmp.eq.s32.totalorder %s19, 1
      %p63 = por %p61, %p62
      %p64 = scmp.ne.s32.totalorder %s53, %s54
      %p65 = scmp.eq.s32.totalorder %s19, 0
      %p66 = por %p64, %p65
      %p67 = scmp.ne.s32.totalorder %s53, %s54
      %p68 = scmp.eq.s32.totalorder %s20, 1
      %p69 = por %p67, %p68
      %p71 = scmp.ne.s32.totalorder %s54, %s70
      %p72 = scmp.eq.s32.totalorder %s20, 0
      %p73 = por %p71, %p72
      %s75 = sadd.s32 %s74, 1
      %p78 = scmp.eq.s32.totalorder %s14, 1
      %p79 = scmp.ne.s32.totalorder %s74, %s76
      %p80 = scmp.eq.s32.totalorder %s14, 0
      %p81 = por %p79, %p80
      %p82 = scmp.ne.s32.totalorder %s74, %s76
      %p83 = scmp.eq.s32.totalorder %s19, 1
      %p84 = por %p82, %p83
      %p85 = scmp.ne.s32.totalorder %s76, %s77
      %p86 = scmp.eq.s32.totalorder %s19, 0
      %p87 = por %p85, %p86
      %p88 = scmp.ne.s32.totalorder %s76, %s77
      %p89 = scmp.eq.s32.totalorder %s20, 1
      %p90 = por %p88, %p89
      %p92 = scmp.ne.s32.totalorder %s77, %s91
      %p93 = scmp.eq.s32.totalorder %s20, 0
      %p94 = por %p92, %p93
      %s96 = sadd.s32 %s95, 1
      %p99 = scmp.eq.s32.totalorder %s14, 1
      %p100 = scmp.ne.s32.totalorder %s95, %s97
      %p101 = scmp.eq.s32.totalorder %s14, 0
      %p102 = por %p100, %p101
      %p103 = scmp.ne.s32.totalorder %s95, %s97
      %p104 = scmp.eq.s32.totalorder %s19, 1
      %p105 = por %p103, %p104
      %p106 = scmp.ne.s32.totalorder %s97, %s98
      %p107 = scmp.eq.s32.totalorder %s19, 0
      %p108 = por %p106, %p107
      %p109 = scmp.ne.s32.totalorder %s97, %s98
      %p110 = scmp.eq.s32.totalorder %s20, 1
      %p111 = por %p109, %p110
      %p113 = scmp.ne.s32.totalorder %s98, %s112
      %p114 = scmp.eq.s32.totalorder %s20, 0
      %p115 = por %p113, %p114
      %s116 = ssub.s32 %s14, %s21
      %p117 = scmp.eq.s32.totalorder %s116, 0
      %s119 = sadd.s32 %s118, 1
      %s120 = scalar_select %p117, %s118, %s119
      %p123 = pneg %p117
      %p124 = scmp.eq.s32.totalorder %s14, 1
      %p125 = por %p123, %p124
      %p126 = scmp.ne.s32.totalorder %s118, %s121
      %p127 = scmp.eq.s32.totalorder %s14, 0
      %p128 = por %p126, %p127
      %p129 = scmp.ne.s32.totalorder %s118, %s121
      %p130 = scmp.eq.s32.totalorder %s19, 1
      %p131 = por %p129, %p130
      %p132 = scmp.ne.s32.totalorder %s121, %s122
      %p133 = scmp.eq.s32.totalorder %s19, 0
      %p134 = por %p132, %p133
      %p135 = scmp.ne.s32.totalorder %s121, %s122
      %p136 = scmp.eq.s32.totalorder %s20, 1
      %p137 = por %p135, %p136
      %p139 = scmp.ne.s32.totalorder %s122, %s138
      %p140 = scmp.eq.s32.totalorder %s20, 0
      %p141 = por %p139, %p140
      %p142 = scmp.le.s32.totalorder 1, %s14
      %p143 = scmp.lt.s32.totalorder %s14, 3
      %p144 = pnand %p142, %p143
      %p145 = pneg %p144
      // Predicated region
      $region9: #{conv_token_embedder.1} parent=5 // pred_check
        _
      $region10: #{conv_token_embedder.1} parent=5 // pred_check_branch
        %147 = sbr.rel (%p144) target = $region12
      $region11: #{conv_token_embedder.1} parent=5 // pred_region
        %s148 = ssub.s32 %s14, 1
        // Predicated region
        $region13: #{conv_token_embedder.1} parent=11 // pred_check
          %p149 = pneg %p87
        $region14: #{conv_token_embedder.1} parent=11 // pred_check_branch
          %151 = sbr.rel (%p149) target = $region16
        $region15: #{conv_token_embedder.1} parent=11 // pred_region
          %s153 = ssub.s32 19456, 19456
          %154 = vsyncadd [#allocation3], %s153
          %s155 = sshll.u32 [#allocation2], 4
          %s156 = int_to_ptr.vmem [resolvable:$true] %s155
          %161 = dma.hbm_to_vmem [thread:$0]  %s2, 19456, %s156, [#allocation3], 1216, 1216, 76
        $region16: #{conv_token_embedder.1} parent=11 // pred_fallthru
          _
        // Predicated region
        $region17: #{conv_token_embedder.1} parent=11 // pred_check
          %p162 = pneg %p108
        $region18: #{conv_token_embedder.1} parent=11 // pred_check_branch
          %164 = sbr.rel (%p162) target = $region20
        $region19: #{conv_token_embedder.1} parent=11 // pred_region
          _
        $region20: #{conv_token_embedder.1} parent=11 // pred_fallthru
          _
      $region12: #{conv_token_embedder.1} parent=5 // pred_fallthru
        _
      %p165 = scmp.lt.s32.totalorder %s14, 2
      // Predicated region
      $region21: #{conv_token_embedder.1} parent=5 // pred_check
        %p166 = pneg %p165
      $region22: #{conv_token_embedder.1} parent=5 // pred_check_branch
        %168 = sbr.rel (%p166) target = $region24
      $region23: #{conv_token_embedder.1} parent=5 // pred_region
        // Predicated region
        $region25: #{conv_token_embedder.1} parent=23 // pred_check
          %p169 = pneg %p34
        $region26: #{conv_token_embedder.1} parent=23 // pred_check_branch
          %171 = sbr.rel (%p169) target = $region28
        $region27: #{conv_token_embedder.1} parent=23 // pred_region
          %p172 = scmp.lt.s32.totalorder %s14, 1
          %s173 = scalar_select %p172, %s14, 1
          %s174 = smul.addr %s173, 4
          %s175 = scalar_lea.vmem %s0, %s174
        $region28: #{conv_token_embedder.1} parent=23 // pred_fallthru
          _
        // Predicated region
        $region29: #{conv_token_embedder.1} parent=23 // pred_check
          %p176 = pneg %p60
        $region30: #{conv_token_embedder.1} parent=23 // pred_check_branch
          %178 = sbr.rel (%p176) target = $region32
        $region31: #{conv_token_embedder.1} parent=23 // pred_region
          %p179 = scmp.lt.s32.totalorder %s14, 1
          %s180 = scalar_select %p179, %s14, 1
          %s181 = smul.addr %s180, 4
          %s182 = scalar_lea.vmem %s1, %s181
        $region32: #{conv_token_embedder.1} parent=23 // pred_fallthru
          _
      $region24: #{conv_token_embedder.1} parent=5 // pred_fallthru
        _
      %p183 = scmp.le.s32.totalorder 1, %s14
      %p184 = scmp.lt.s32.totalorder %s14, 3
      %p185 = pnand %p183, %p184
      %p186 = pneg %p185
      // Predicated region
      $region33: #{conv_token_embedder.1} parent=5 // pred_check
        _
      $region34: #{conv_token_embedder.1} parent=5 // pred_check_branch
        %188 = sbr.rel (%p185) target = $region36
      $region35: #{conv_token_embedder.1} parent=5 // pred_region
        %s189 = ssub.s32 %s14, 1
        // Predicated region
        $region37: #{conv_token_embedder.1} parent=35 // pred_check
          %p190 = pneg %p87
        $region38: #{conv_token_embedder.1} parent=35 // pred_check_branch
          %192 = sbr.rel (%p190) target = $region40
        $region39: #{conv_token_embedder.1} parent=35 // pred_region
          %193 = dma.done [#allocation3], 19456
        $region40: #{conv_token_embedder.1} parent=35 // pred_fallthru
          _
        %p194 = scmp.lt.s32.totalorder %s19, 1
        %s195 = scalar_select %p194, %s19, 1
        %s196 = smul.addr %s195, 4
        %s197 = scalar_lea.vmem %s0, %s196
        %p198 = pneg %p40
        %p199 = pneg %p37
        %p200 = scmp.lt.s32.totalorder %s19, 1
        %s201 = scalar_select %p200, %s19, 1
        %s202 = smul.addr %s201, 4
        %s203 = scalar_lea.vmem %s1, %s202
        %p204 = pneg %p66
        %p205 = pneg %p63
        %p206 = pneg %p87
        %p207 = pneg %p84
        %p208 = pneg %p108
        %p209 = pneg %p105
        %p210 = pneg %p134
        %p211 = pneg %p131
        %s212 = sand.u32 %s121, 1
        %s213 = scalar_lea.sflag [#allocation4], %s212
        %s214 = sand.u32 %s121, 1
        %s215 = smul.addr %s214, 8
        %s216 = scalar_lea.vmem [#allocation5], %s215
        %p217 = scmp.lt.s32.totalorder %s19, 1
        %s218 = scalar_select %p217, %s19, 1
        %s219 = smul.addr %s218, 4
        %s220 = scalar_lea.vmem %s0, %s219
        %p221 = scmp.lt.s32.totalorder %s19, 1
        %s222 = scalar_select %p221, %s19, 1
        %s223 = smul.addr %s222, 4
        %s224 = scalar_lea.vmem %s1, %s223
        %v226 = vld [vmem:[%s220] sm:$0xf]
        %v227 = vlaneseq
        %v228 = vand.u32 %v227, 127
        %v229 = vld [vmem:[#allocation2] sm:$0xff]
        %v230 = vld [vmem:[#allocation2 + $0x8] sm:$0xff]
        %v231 = vld [vmem:[#allocation2 + $0x4c] sm:$0xff]
        %v232 = vld [vmem:[#allocation2 + $0x54] sm:$0xff]
        %v233 = vld [vmem:[#allocation2 + $0x98] sm:$0xff]
        %v234 = vld [vmem:[#allocation2 + $0xa0] sm:$0xff]
        %v235 = vld [vmem:[#allocation2 + $0xe4] sm:$0xff]
        %v236 = vld [vmem:[#allocation2 + $0xec] sm:$0xff]
        %v237 = vld [vmem:[#allocation2 + $0x130] sm:$0xff]
        %v238 = vld [vmem:[#allocation2 + $0x138] sm:$0xff]
        %v239 = vld [vmem:[#allocation2 + $0x17c] sm:$0xff]
        %v240 = vld [vmem:[#allocation2 + $0x184] sm:$0xff]
        %v241 = vld [vmem:[#allocation2 + $0x1c8] sm:$0xff]
        %v242 = vld [vmem:[#allocation2 + $0x1d0] sm:$0xff]
        %v243 = vld [vmem:[#allocation2 + $0x214] sm:$0xff]
        %v244 = vld [vmem:[#allocation2 + $0x21c] sm:$0xff]
        %v245 = vld [vmem:[#allocation2 + $0x260] sm:$0xff]
        %v246 = vld [vmem:[#allocation2 + $0x268] sm:$0xff]
        %v247 = vld [vmem:[#allocation2 + $0x2ac] sm:$0xff]
        %v248 = vld [vmem:[#allocation2 + $0x2b4] sm:$0xff]
        %v249 = vld [vmem:[#allocation2 + $0x2f8] sm:$0xff]
        %v250 = vld [vmem:[#allocation2 + $0x300] sm:$0xff]
        %v251 = vld [vmem:[#allocation2 + $0x344] sm:$0xff]
        %v252 = vld [vmem:[#allocation2 + $0x34c] sm:$0xff]
        %v253 = vld [vmem:[#allocation2 + $0x390] sm:$0xff]
        %v254 = vld [vmem:[#allocation2 + $0x398] sm:$0xff]
        %v255 = vld [vmem:[#allocation2 + $0x3dc] sm:$0xff]
        %v256 = vld [vmem:[#allocation2 + $0x3e4] sm:$0xff]
        %v257 = vld [vmem:[#allocation2 + $0x428] sm:$0xff]
        %v258 = vld [vmem:[#allocation2 + $0x430] sm:$0xff]
        %v259 = vld [vmem:[#allocation2 + $0x474] sm:$0xff]
        %v260 = vld [vmem:[#allocation2 + $0x47c] sm:$0xff]
        %v293 = vunpack.c.l.b16 %v229
        %v294 = vunpack.c.h.b16 %v229
        %v295 = vunpack.c.l.b16 %v230
        %v296 = vunpack.c.h.b16 %v230
        %v297 = vunpack.c.l.b16 %v231
        %v298 = vunpack.c.h.b16 %v231
        %v299 = vunpack.c.l.b16 %v232
        %v300 = vunpack.c.h.b16 %v232
        %v301 = vunpack.c.l.b16 %v233
        %v302 = vunpack.c.h.b16 %v233
        %v303 = vunpack.c.l.b16 %v234
        %v304 = vunpack.c.h.b16 %v234
        %v305 = vunpack.c.l.b16 %v235
        %v306 = vunpack.c.h.b16 %v235
        %v307 = vunpack.c.l.b16 %v236
        %v308 = vunpack.c.h.b16 %v236
        %v309 = vunpack.c.l.b16 %v237
        %v310 = vunpack.c.h.b16 %v237
        %v311 = vunpack.c.l.b16 %v238
        %v312 = vunpack.c.h.b16 %v238
        %v313 = vunpack.c.l.b16 %v239
        %v314 = vunpack.c.h.b16 %v239
        %v315 = vunpack.c.l.b16 %v240
        %v316 = vunpack.c.h.b16 %v240
        %v317 = vunpack.c.l.b16 %v241
        %v318 = vunpack.c.h.b16 %v241
        %v319 = vunpack.c.l.b16 %v242
        %v320 = vunpack.c.h.b16 %v242
        %v321 = vunpack.c.l.b16 %v243
        %v322 = vunpack.c.h.b16 %v243
        %v323 = vunpack.c.l.b16 %v244
        %v324 = vunpack.c.h.b16 %v244
        %v325 = vunpack.c.l.b16 %v245
        %v326 = vunpack.c.h.b16 %v245
        %v327 = vunpack.c.l.b16 %v246
        %v328 = vunpack.c.h.b16 %v246
        %v329 = vunpack.c.l.b16 %v247
        %v330 = vunpack.c.h.b16 %v247
        %v331 = vunpack.c.l.b16 %v248
        %v332 = vunpack.c.h.b16 %v248
        %v333 = vunpack.c.l.b16 %v249
        %v334 = vunpack.c.h.b16 %v249
        %v335 = vunpack.c.l.b16 %v250
        %v336 = vunpack.c.h.b16 %v250
        %v337 = vunpack.c.l.b16 %v251
        %v338 = vunpack.c.h.b16 %v251
        %v339 = vunpack.c.l.b16 %v252
        %v340 = vunpack.c.h.b16 %v252
        %v341 = vunpack.c.l.b16 %v253
        %v342 = vunpack.c.h.b16 %v253
        %v343 = vunpack.c.l.b16 %v254
        %v344 = vunpack.c.h.b16 %v254
        %v345 = vunpack.c.l.b16 %v255
        %v346 = vunpack.c.h.b16 %v255
        %v347 = vunpack.c.l.b16 %v256
        %v348 = vunpack.c.h.b16 %v256
        %v349 = vunpack.c.l.b16 %v257
        %v350 = vunpack.c.h.b16 %v257
        %v351 = vunpack.c.l.b16 %v258
        %v352 = vunpack.c.h.b16 %v258
        %v353 = vunpack.c.l.b16 %v259
        %v354 = vunpack.c.h.b16 %v259
        %v355 = vunpack.c.l.b16 %v260
        %v356 = vunpack.c.h.b16 %v260
        %v357 = vpack.c.b16 %v297, %v293
        %v358 = vpack.c.b16 %v298, %v294
        %v359 = vpack.c.b16 %v299, %v295
        %v360 = vpack.c.b16 %v300, %v296
        %v361 = vpack.c.b16 %v305, %v301
        %v362 = vpack.c.b16 %v306, %v302
        %v363 = vpack.c.b16 %v307, %v303
        %v364 = vpack.c.b16 %v308, %v304
        %v365 = vpack.c.b16 %v313, %v309
        %v366 = vpack.c.b16 %v314, %v310
        %v367 = vpack.c.b16 %v315, %v311
        %v368 = vpack.c.b16 %v316, %v312
        %v369 = vpack.c.b16 %v321, %v317
        %v370 = vpack.c.b16 %v322, %v318
        %v371 = vpack.c.b16 %v323, %v319
        %v372 = vpack.c.b16 %v324, %v320
        %v373 = vpack.c.b16 %v329, %v325
        %v374 = vpack.c.b16 %v330, %v326
        %v375 = vpack.c.b16 %v331, %v327
        %v376 = vpack.c.b16 %v332, %v328
        %v377 = vpack.c.b16 %v337, %v333
        %v378 = vpack.c.b16 %v338, %v334
        %v379 = vpack.c.b16 %v339, %v335
        %v380 = vpack.c.b16 %v340, %v336
        %v381 = vpack.c.b16 %v345, %v341
        %v382 = vpack.c.b16 %v346, %v342
        %v383 = vpack.c.b16 %v347, %v343
        %v384 = vpack.c.b16 %v348, %v344
        %v385 = vpack.c.b16 %v353, %v349
        %v386 = vpack.c.b16 %v354, %v350
        %v387 = vpack.c.b16 %v355, %v351
        %v388 = vpack.c.b16 %v356, %v352
        %421 = vmatprep.subr.bf16.mxu0 %v386
        %422 = vmatpush1.bf16.msra.mxu0 %v385
        %423 = vmatprep.subr.bf16.mxu0 %v382
        %424 = vmatpush1.bf16.msra.mxu0 %v381
        %425 = vmatprep.subr.bf16.mxu0 %v378
        %426 = vmatpush1.bf16.msra.mxu0 %v377
        %427 = vmatprep.subr.bf16.mxu0 %v374
        %428 = vmatpush1.bf16.msra.mxu0 %v373
        %429 = vmatprep.subr.bf16.mxu0 %v370
        %430 = vmatpush1.bf16.msra.mxu0 %v369
        %431 = vmatprep.subr.bf16.mxu0 %v366
        %432 = vmatpush1.bf16.msra.mxu0 %v365
        %433 = vmatprep.subr.bf16.mxu0 %v362
        %434 = vmatpush1.bf16.msra.mxu0 %v361
        %435 = vmatprep.subr.bf16.mxu0 %v358
        %436 = vmatpush1.bf16.msra.mxu0 %v357
        %437 = vmatprep.subr.bf16.mxu0 0
        %438 = vmatpush2.bf16.msra.mxu0 0
        %439 = vmatprep.subr.bf16.mxu0 0
        %440 = vmatpush2.bf16.msra.mxu0 0
        %441 = vmatprep.subr.bf16.mxu0 0
        %442 = vmatpush2.bf16.msra.mxu0 0
        %443 = vmatprep.subr.bf16.mxu0 0
        %444 = vmatpush2.bf16.msra.mxu0 0
        %445 = vmatprep.subr.bf16.mxu0 0
        %446 = vmatpush2.bf16.msra.mxu0 0
        %447 = vmatprep.subr.bf16.mxu0 0
        %448 = vmatpush2.bf16.msra.mxu0 0
        %449 = vmatprep.subr.bf16.mxu0 0
        %450 = vmatpush2.bf16.msra.mxu0 0
        %451 = vmatprep.subr.bf16.mxu0 0
        %452 = vmatpush2.bf16.msra.mxu0 0
        %453 = vmatprep.mubr.bf16.mxu0 0
        %454 = vmatmul.mubr.bf16.gmra.mxu0 %v226
        %v455 = vpop.f32.mrf.mxu0
        %v456 = vadd.f32 0.0, %v455
        %v457 = vpop.f32.mrf.mxu0
        %v458 = vadd.f32 0.0, %v457
        %v459 = vpop.f32.mrf.mxu0
        %v460 = vpop.f32.mrf.mxu0
        %461 = vdwg.mxu0
        %462 = vmatprep.subr.bf16.mxu0 %v388
        %463 = vmatpush1.bf16.msra.mxu0 %v387
        %464 = vmatprep.subr.bf16.mxu0 %v384
        %465 = vmatpush1.bf16.msra.mxu0 %v383
        %466 = vmatprep.subr.bf16.mxu0 %v380
        %467 = vmatpush1.bf16.msra.mxu0 %v379
        %468 = vmatprep.subr.bf16.mxu0 %v376
        %469 = vmatpush1.bf16.msra.mxu0 %v375
        %470 = vmatprep.subr.bf16.mxu0 %v372
        %471 = vmatpush1.bf16.msra.mxu0 %v371
        %472 = vmatprep.subr.bf16.mxu0 %v368
        %473 = vmatpush1.bf16.msra.mxu0 %v367
        %474 = vmatprep.subr.bf16.mxu0 %v364
        %475 = vmatpush1.bf16.msra.mxu0 %v363
        %476 = vmatprep.subr.bf16.mxu0 %v360
        %477 = vmatpush1.bf16.msra.mxu0 %v359
        %478 = vmatprep.subr.bf16.mxu0 0
        %479 = vmatpush2.bf16.msra.mxu0 0
        %480 = vmatprep.subr.bf16.mxu0 0
        %481 = vmatpush2.bf16.msra.mxu0 0
        %482 = vmatprep.subr.bf16.mxu0 0
        %483 = vmatpush2.bf16.msra.mxu0 0
        %484 = vmatprep.subr.bf16.mxu0 0
        %485 = vmatpush2.bf16.msra.mxu0 0
        %486 = vmatprep.subr.bf16.mxu0 0
        %487 = vmatpush2.bf16.msra.mxu0 0
        %488 = vmatprep.subr.bf16.mxu0 0
        %489 = vmatpush2.bf16.msra.mxu0 0
        %490 = vmatprep.subr.bf16.mxu0 0
        %491 = vmatpush2.bf16.msra.mxu0 0
        %492 = vmatprep.subr.bf16.mxu0 0
        %493 = vmatpush2.bf16.msra.mxu0 0
        %494 = vmatprep.mubr.bf16.mxu0 0
        %495 = vmatmul.mubr.bf16.gmra.mxu0 %v226
        %v496 = vpop.f32.mrf.mxu0
        %v497 = vadd.f32 0.0, %v496
        %v498 = vpop.f32.mrf.mxu0
        %v499 = vadd.f32 0.0, %v498
        %v500 = vpop.f32.mrf.mxu0
        %v501 = vpop.f32.mrf.mxu0
        %502 = vdwg.mxu0
        %v503 = vmax.f32 %v456, -3e+38
        %v504 = vmax.f32 %v503, %v458
        %v505 = vmax.f32 %v504, %v497
        %v506 = vmax.f32 %v505, %v499
        %v507 = vld [vmem:[#allocation2 + $0x10] sm:$0xff]
        %v508 = vld [vmem:[#allocation2 + $0x18] sm:$0xff]
        %v509 = vld [vmem:[#allocation2 + $0x5c] sm:$0xff]
        %v510 = vld [vmem:[#allocation2 + $0x64] sm:$0xff]
        %v511 = vld [vmem:[#allocation2 + $0xa8] sm:$0xff]
        %v512 = vld [vmem:[#allocation2 + $0xb0] sm:$0xff]
        %v513 = vld [vmem:[#allocation2 + $0xf4] sm:$0xff]
        %v514 = vld [vmem:[#allocation2 + $0xfc] sm:$0xff]
        %v515 = vld [vmem:[#allocation2 + $0x140] sm:$0xff]
        %v516 = vld [vmem:[#allocation2 + $0x148] sm:$0xff]
        %v517 = vld [vmem:[#allocation2 + $0x18c] sm:$0xff]
        %v518 = vld [vmem:[#allocation2 + $0x194] sm:$0xff]
        %v519 = vld [vmem:[#allocation2 + $0x1d8] sm:$0xff]
        %v520 = vld [vmem:[#allocation2 + $0x1e0] sm:$0xff]
        %v521 = vld [vmem:[#allocation2 + $0x224] sm:$0xff]
        %v522 = vld [vmem:[#allocation2 + $0x22c] sm:$0xff]
        %v523 = vld [vmem:[#allocation2 + $0x270] sm:$0xff]
        %v524 = vld [vmem:[#allocation2 + $0x278] sm:$0xff]
        %v525 = vld [vmem:[#allocation2 + $0x2bc] sm:$0xff]
        %v526 = vld [vmem:[#allocation2 + $0x2c4] sm:$0xff]
        %v527 = vld [vmem:[#allocation2 + $0x308] sm:$0xff]
        %v528 = vld [vmem:[#allocation2 + $0x310] sm:$0xff]
        %v529 = vld [vmem:[#allocation2 + $0x354] sm:$0xff]
        %v530 = vld [vmem:[#allocation2 + $0x35c] sm:$0xff]
        %v531 = vld [vmem:[#allocation2 + $0x3a0] sm:$0xff]
        %v532 = vld [vmem:[#allocation2 + $0x3a8] sm:$0xff]
        %v533 = vld [vmem:[#allocation2 + $0x3ec] sm:$0xff]
        %v534 = vld [vmem:[#allocation2 + $0x3f4] sm:$0xff]
        %v535 = vld [vmem:[#allocation2 + $0x438] sm:$0xff]
        %v536 = vld [vmem:[#allocation2 + $0x440] sm:$0xff]
        %v537 = vld [vmem:[#allocation2 + $0x484] sm:$0xff]
        %v538 = vld [vmem:[#allocation2 + $0x48c] sm:$0xff]
        %v571 = vunpack.c.l.b16 %v507
        %v572 = vunpack.c.h.b16 %v507
        %v573 = vunpack.c.l.b16 %v508
        %v574 = vunpack.c.h.b16 %v508
        %v575 = vunpack.c.l.b16 %v509
        %v576 = vunpack.c.h.b16 %v509
        %v577 = vunpack.c.l.b16 %v510
        %v578 = vunpack.c.h.b16 %v510
        %v579 = vunpack.c.l.b16 %v511
        %v580 = vunpack.c.h.b16 %v511
        %v581 = vunpack.c.l.b16 %v512
        %v582 = vunpack.c.h.b16 %v512
        %v583 = vunpack.c.l.b16 %v513
        %v584 = vunpack.c.h.b16 %v513
        %v585 = vunpack.c.l.b16 %v514
        %v586 = vunpack.c.h.b16 %v514
        %v587 = vunpack.c.l.b16 %v515
        %v588 = vunpack.c.h.b16 %v515
        %v589 = vunpack.c.l.b16 %v516
        %v590 = vunpack.c.h.b16 %v516
        %v591 = vunpack.c.l.b16 %v517
        %v592 = vunpack.c.h.b16 %v517
        %v593 = vunpack.c.l.b16 %v518
        %v594 = vunpack.c.h.b16 %v518
        %v595 = vunpack.c.l.b16 %v519
        %v596 = vunpack.c.h.b16 %v519
        %v597 = vunpack.c.l.b16 %v520
        %v598 = vunpack.c.h.b16 %v520
        %v599 = vunpack.c.l.b16 %v521
        %v600 = vunpack.c.h.b16 %v521
        %v601 = vunpack.c.l.b16 %v522
        %v602 = vunpack.c.h.b16 %v522
        %v603 = vunpack.c.l.b16 %v523
        %v604 = vunpack.c.h.b16 %v523
        %v605 = vunpack.c.l.b16 %v524
        %v606 = vunpack.c.h.b16 %v524
        %v607 = vunpack.c.l.b16 %v525
        %v608 = vunpack.c.h.b16 %v525
        %v609 = vunpack.c.l.b16 %v526
        %v610 = vunpack.c.h.b16 %v526
        %v611 = vunpack.c.l.b16 %v527
        %v612 = vunpack.c.h.b16 %v527
        %v613 = vunpack.c.l.b16 %v528
        %v614 = vunpack.c.h.b16 %v528
        %v615 = vunpack.c.l.b16 %v529
        %v616 = vunpack.c.h.b16 %v529
        %v617 = vunpack.c.l.b16 %v530
        %v618 = vunpack.c.h.b16 %v530
        %v619 = vunpack.c.l.b16 %v531
        %v620 = vunpack.c.h.b16 %v531
        %v621 = vunpack.c.l.b16 %v532
        %v622 = vunpack.c.h.b16 %v532
        %v623 = vunpack.c.l.b16 %v533
        %v624 = vunpack.c.h.b16 %v533
        %v625 = vunpack.c.l.b16 %v534
        %v626 = vunpack.c.h.b16 %v534
        %v627 = vunpack.c.l.b16 %v535
        %v628 = vunpack.c.h.b16 %v535
        %v629 = vunpack.c.l.b16 %v536
        %v630 = vunpack.c.h.b16 %v536
        %v631 = vunpack.c.l.b16 %v537
        %v632 = vunpack.c.h.b16 %v537
        %v633 = vunpack.c.l.b16 %v538
        %v634 = vunpack.c.h.b16 %v538
        %v635 = vpack.c.b16 %v575, %v571
        %v636 = vpack.c.b16 %v576, %v572
        %v637 = vpack.c.b16 %v577, %v573
        %v638 = vpack.c.b16 %v578, %v574
        %v639 = vpack.c.b16 %v583, %v579
        %v640 = vpack.c.b16 %v584, %v580
        %v641 = vpack.c.b16 %v585, %v581
        %v642 = vpack.c.b16 %v586, %v582
        %v643 = vpack.c.b16 %v591, %v587
        %v644 = vpack.c.b16 %v592, %v588
        %v645 = vpack.c.b16 %v593, %v589
        %v646 = vpack.c.b16 %v594, %v590
        %v647 = vpack.c.b16 %v599, %v595
        %v648 = vpack.c.b16 %v600, %v596
        %v649 = vpack.c.b16 %v601, %v597
        %v650 = vpack.c.b16 %v602, %v598
        %v651 = vpack.c.b16 %v607, %v603
        %v652 = vpack.c.b16 %v608, %v604
        %v653 = vpack.c.b16 %v609, %v605
        %v654 = vpack.c.b16 %v610, %v606
        %v655 = vpack.c.b16 %v615, %v611
        %v656 = vpack.c.b16 %v616, %v612
        %v657 = vpack.c.b16 %v617, %v613
        %v658 = vpack.c.b16 %v618, %v614
        %v659 = vpack.c.b16 %v623, %v619
        %v660 = vpack.c.b16 %v624, %v620
        %v661 = vpack.c.b16 %v625, %v621
        %v662 = vpack.c.b16 %v626, %v622
        %v663 = vpack.c.b16 %v631, %v627
        %v664 = vpack.c.b16 %v632, %v628
        %v665 = vpack.c.b16 %v633, %v629
        %v666 = vpack.c.b16 %v634, %v630
        %699 = vmatprep.subr.bf16.mxu0 %v664
        %700 = vmatpush1.bf16.msra.mxu0 %v663
        %701 = vmatprep.subr.bf16.mxu0 %v660
        %702 = vmatpush1.bf16.msra.mxu0 %v659
        %703 = vmatprep.subr.bf16.mxu0 %v656
        %704 = vmatpush1.bf16.msra.mxu0 %v655
        %705 = vmatprep.subr.bf16.mxu0 %v652
        %706 = vmatpush1.bf16.msra.mxu0 %v651
        %707 = vmatprep.subr.bf16.mxu0 %v648
        %708 = vmatpush1.bf16.msra.mxu0 %v647
        %709 = vmatprep.subr.bf16.mxu0 %v644
        %710 = vmatpush1.bf16.msra.mxu0 %v643
        %711 = vmatprep.subr.bf16.mxu0 %v640
        %712 = vmatpush1.bf16.msra.mxu0 %v639
        %713 = vmatprep.subr.bf16.mxu0 %v636
        %714 = vmatpush1.bf16.msra.mxu0 %v635
        %715 = vmatprep.subr.bf16.mxu0 0
        %716 = vmatpush2.bf16.msra.mxu0 0
        %717 = vmatprep.subr.bf16.mxu0 0
        %718 = vmatpush2.bf16.msra.mxu0 0
        %719 = vmatprep.subr.bf16.mxu0 0
        %720 = vmatpush2.bf16.msra.mxu0 0
        %721 = vmatprep.subr.bf16.mxu0 0
        %722 = vmatpush2.bf16.msra.mxu0 0
        %723 = vmatprep.subr.bf16.mxu0 0
        %724 = vmatpush2.bf16.msra.mxu0 0
        %725 = vmatprep.subr.bf16.mxu0 0
        %726 = vmatpush2.bf16.msra.mxu0 0
        %727 = vmatprep.subr.bf16.mxu0 0
        %728 = vmatpush2.bf16.msra.mxu0 0
        %729 = vmatprep.subr.bf16.mxu0 0
        %730 = vmatpush2.bf16.msra.mxu0 0
        %731 = vmatprep.mubr.bf16.mxu0 0
        %732 = vmatmul.mubr.bf16.gmra.mxu0 %v226
        %v733 = vpop.f32.mrf.mxu0
        %v734 = vadd.f32 0.0, %v733
        %v735 = vpop.f32.mrf.mxu0
        %v736 = vadd.f32 0.0, %v735
        %v737 = vpop.f32.mrf.mxu0
        %v738 = vpop.f32.mrf.mxu0
        %739 = vdwg.mxu0
        %740 = vmatprep.subr.bf16.mxu0 %v666
        %741 = vmatpush1.bf16.msra.mxu0 %v665
        %742 = vmatprep.subr.bf16.mxu0 %v662
        %743 = vmatpush1.bf16.msra.mxu0 %v661
        %744 = vmatprep.subr.bf16.mxu0 %v658
        %745 = vmatpush1.bf16.msra.mxu0 %v657
        %746 = vmatprep.subr.bf16.mxu0 %v654
        %747 = vmatpush1.bf16.msra.mxu0 %v653
        %748 = vmatprep.subr.bf16.mxu0 %v650
        %749 = vmatpush1.bf16.msra.mxu0 %v649
        %750 = vmatprep.subr.bf16.mxu0 %v646
        %751 = vmatpush1.bf16.msra.mxu0 %v645
        %752 = vmatprep.subr.bf16.mxu0 %v642
        %753 = vmatpush1.bf16.msra.mxu0 %v641
        %754 = vmatprep.subr.bf16.mxu0 %v638
        %755 = vmatpush1.bf16.msra.mxu0 %v637
        %756 = vmatprep.subr.bf16.mxu0 0
        %757 = vmatpush2.bf16.msra.mxu0 0
        %758 = vmatprep.subr.bf16.mxu0 0
        %759 = vmatpush2.bf16.msra.mxu0 0
        %760 = vmatprep.subr.bf16.mxu0 0
        %761 = vmatpush2.bf16.msra.mxu0 0
        %762 = vmatprep.subr.bf16.mxu0 0
        %763 = vmatpush2.bf16.msra.mxu0 0
        %764 = vmatprep.subr.bf16.mxu0 0
        %765 = vmatpush2.bf16.msra.mxu0 0
        %766 = vmatprep.subr.bf16.mxu0 0
        %767 = vmatpush2.bf16.msra.mxu0 0
        %768 = vmatprep.subr.bf16.mxu0 0
        %769 = vmatpush2.bf16.msra.mxu0 0
        %770 = vmatprep.subr.bf16.mxu0 0
        %771 = vmatpush2.bf16.msra.mxu0 0
        %772 = vmatprep.mubr.bf16.mxu0 0
        %773 = vmatmul.mubr.bf16.gmra.mxu0 %v226
        %v774 = vpop.f32.mrf.mxu0
        %v775 = vadd.f32 0.0, %v774
        %v776 = vpop.f32.mrf.mxu0
        %v777 = vadd.f32 0.0, %v776
        %v778 = vpop.f32.mrf.mxu0
        %v779 = vpop.f32.mrf.mxu0
        %780 = vdwg.mxu0
        %v781 = vmax.f32 %v506, %v734
        %v782 = vmax.f32 %v781, %v736
        %v783 = vmax.f32 %v782, %v775
        %v784 = vmax.f32 %v783, %v777
        %v785 = vld [vmem:[#allocation2 + $0x20] sm:$0xff]
        %v786 = vld [vmem:[#allocation2 + $0x28] sm:$0xff]
        %v787 = vld [vmem:[#allocation2 + $0x6c] sm:$0xff]
        %v788 = vld [vmem:[#allocation2 + $0x74] sm:$0xff]
        %v789 = vld [vmem:[#allocation2 + $0xb8] sm:$0xff]
        %v790 = vld [vmem:[#allocation2 + $0xc0] sm:$0xff]
        %v791 = vld [vmem:[#allocation2 + $0x104] sm:$0xff]
        %v792 = vld [vmem:[#allocation2 + $0x10c] sm:$0xff]
        %v793 = vld [vmem:[#allocation2 + $0x150] sm:$0xff]
        %v794 = vld [vmem:[#allocation2 + $0x158] sm:$0xff]
        %v795 = vld [vmem:[#allocation2 + $0x19c] sm:$0xff]
        %v796 = vld [vmem:[#allocation2 + $0x1a4] sm:$0xff]
        %v797 = vld [vmem:[#allocation2 + $0x1e8] sm:$0xff]
        %v798 = vld [vmem:[#allocation2 + $0x1f0] sm:$0xff]
        %v799 = vld [vmem:[#allocation2 + $0x234] sm:$0xff]
        %v800 = vld [vmem:[#allocation2 + $0x23c] sm:$0xff]
        %v801 = vld [vmem:[#allocation2 + $0x280] sm:$0xff]
        %v802 = vld [vmem:[#allocation2 + $0x288] sm:$0xff]
        %v803 = vld [vmem:[#allocation2 + $0x2cc] sm:$0xff]
        %v804 = vld [vmem:[#allocation2 + $0x2d4] sm:$0xff]
        %v805 = vld [vmem:[#allocation2 + $0x318] sm:$0xff]
        %v806 = vld [vmem:[#allocation2 + $0x320] sm:$0xff]
        %v807 = vld [vmem:[#allocation2 + $0x364] sm:$0xff]
        %v808 = vld [vmem:[#allocation2 + $0x36c] sm:$0xff]
        %v809 = vld [vmem:[#allocation2 + $0x3b0] sm:$0xff]
        %v810 = vld [vmem:[#allocation2 + $0x3b8] sm:$0xff]
        %v811 = vld [vmem:[#allocation2 + $0x3fc] sm:$0xff]
        %v812 = vld [vmem:[#allocation2 + $0x404] sm:$0xff]
        %v813 = vld [vmem:[#allocation2 + $0x448] sm:$0xff]
        %v814 = vld [vmem:[#allocation2 + $0x450] sm:$0xff]
        %v815 = vld [vmem:[#allocation2 + $0x494] sm:$0xff]
        %v816 = vld [vmem:[#allocation2 + $0x49c] sm:$0xff]
        %v849 = vunpack.c.l.b16 %v785
        %v850 = vunpack.c.h.b16 %v785
        %v851 = vunpack.c.l.b16 %v786
        %v852 = vunpack.c.h.b16 %v786
        %v853 = vunpack.c.l.b16 %v787
        %v854 = vunpack.c.h.b16 %v787
        %v855 = vunpack.c.l.b16 %v788
        %v856 = vunpack.c.h.b16 %v788
        %v857 = vunpack.c.l.b16 %v789
        %v858 = vunpack.c.h.b16 %v789
        %v859 = vunpack.c.l.b16 %v790
        %v860 = vunpack.c.h.b16 %v790
        %v861 = vunpack.c.l.b16 %v791
        %v862 = vunpack.c.h.b16 %v791
        %v863 = vunpack.c.l.b16 %v792
        %v864 = vunpack.c.h.b16 %v792
        %v865 = vunpack.c.l.b16 %v793
        %v866 = vunpack.c.h.b16 %v793
        %v867 = vunpack.c.l.b16 %v794
        %v868 = vunpack.c.h.b16 %v794
        %v869 = vunpack.c.l.b16 %v795
        %v870 = vunpack.c.h.b16 %v795
        %v871 = vunpack.c.l.b16 %v796
        %v872 = vunpack.c.h.b16 %v796
        %v873 = vunpack.c.l.b16 %v797
        %v874 = vunpack.c.h.b16 %v797
        %v875 = vunpack.c.l.b16 %v798
        %v876 = vunpack.c.h.b16 %v798
        %v877 = vunpack.c.l.b16 %v799
        %v878 = vunpack.c.h.b16 %v799
        %v879 = vunpack.c.l.b16 %v800
        %v880 = vunpack.c.h.b16 %v800
        %v881 = vunpack.c.l.b16 %v801
        %v882 = vunpack.c.h.b16 %v801
        %v883 = vunpack.c.l.b16 %v802
        %v884 = vunpack.c.h.b16 %v802
        %v885 = vunpack.c.l.b16 %v803
        %v886 = vunpack.c.h.b16 %v803
        %v887 = vunpack.c.l.b16 %v804
        %v888 = vunpack.c.h.b16 %v804
        %v889 = vunpack.c.l.b16 %v805
        %v890 = vunpack.c.h.b16 %v805
        %v891 = vunpack.c.l.b16 %v806
        %v892 = vunpack.c.h.b16 %v806
        %v893 = vunpack.c.l.b16 %v807
        %v894 = vunpack.c.h.b16 %v807
        %v895 = vunpack.c.l.b16 %v808
        %v896 = vunpack.c.h.b16 %v808
        %v897 = vunpack.c.l.b16 %v809
        %v898 = vunpack.c.h.b16 %v809
        %v899 = vunpack.c.l.b16 %v810
        %v900 = vunpack.c.h.b16 %v810
        %v901 = vunpack.c.l.b16 %v811
        %v902 = vunpack.c.h.b16 %v811
        %v903 = vunpack.c.l.b16 %v812
        %v904 = vunpack.c.h.b16 %v812
        %v905 = vunpack.c.l.b16 %v813
        %v906 = vunpack.c.h.b16 %v813
        %v907 = vunpack.c.l.b16 %v814
        %v908 = vunpack.c.h.b16 %v814
        %v909 = vunpack.c.l.b16 %v815
        %v910 = vunpack.c.h.b16 %v815
        %v911 = vunpack.c.l.b16 %v816
        %v912 = vunpack.c.h.b16 %v816
        %v913 = vpack.c.b16 %v853, %v849
        %v914 = vpack.c.b16 %v854, %v850
        %v915 = vpack.c.b16 %v855, %v851
        %v916 = vpack.c.b16 %v856, %v852
        %v917 = vpack.c.b16 %v861, %v857
        %v918 = vpack.c.b16 %v862, %v858
        %v919 = vpack.c.b16 %v863, %v859
        %v920 = vpack.c.b16 %v864, %v860
        %v921 = vpack.c.b16 %v869, %v865
        %v922 = vpack.c.b16 %v870, %v866
        %v923 = vpack.c.b16 %v871, %v867
        %v924 = vpack.c.b16 %v872, %v868
        %v925 = vpack.c.b16 %v877, %v873
        %v926 = vpack.c.b16 %v878, %v874
        %v927 = vpack.c.b16 %v879, %v875
        %v928 = vpack.c.b16 %v880, %v876
        %v929 = vpack.c.b16 %v885, %v881
        %v930 = vpack.c.b16 %v886, %v882
        %v931 = vpack.c.b16 %v887, %v883
        %v932 = vpack.c.b16 %v888, %v884
        %v933 = vpack.c.b16 %v893, %v889
        %v934 = vpack.c.b16 %v894, %v890
        %v935 = vpack.c.b16 %v895, %v891
        %v936 = vpack.c.b16 %v896, %v892
        %v937 = vpack.c.b16 %v901, %v897
        %v938 = vpack.c.b16 %v902, %v898
        %v939 = vpack.c.b16 %v903, %v899
        %v940 = vpack.c.b16 %v904, %v900
        %v941 = vpack.c.b16 %v909, %v905
        %v942 = vpack.c.b16 %v910, %v906
        %v943 = vpack.c.b16 %v911, %v907
        %v944 = vpack.c.b16 %v912, %v908
        %977 = vmatprep.subr.bf16.mxu0 %v942
        %978 = vmatpush1.bf16.msra.mxu0 %v941
        %979 = vmatprep.subr.bf16.mxu0 %v938
        %980 = vmatpush1.bf16.msra.mxu0 %v937
        %981 = vmatprep.subr.bf16.mxu0 %v934
        %982 = vmatpush1.bf16.msra.mxu0 %v933
        %983 = vmatprep.subr.bf16.mxu0 %v930
        %984 = vmatpush1.bf16.msra.mxu0 %v929
        %985 = vmatprep.subr.bf16.mxu0 %v926
        %986 = vmatpush1.bf16.msra.mxu0 %v925
        %987 = vmatprep.subr.bf16.mxu0 %v922
        %988 = vmatpush1.bf16.msra.mxu0 %v921
        %989 = vmatprep.subr.bf16.mxu0 %v918
        %990 = vmatpush1.bf16.msra.mxu0 %v917
        %991 = vmatprep.subr.bf16.mxu0 %v914
        %992 = vmatpush1.bf16.msra.mxu0 %v913
        %993 = vmatprep.subr.bf16.mxu0 0
        %994 = vmatpush2.bf16.msra.mxu0 0
        %995 = vmatprep.subr.bf16.mxu0 0
        %996 = vmatpush2.bf16.msra.mxu0 0
        %997 = vmatprep.subr.bf16.mxu0 0
        %998 = vmatpush2.bf16.msra.mxu0 0
        %999 = vmatprep.subr.bf16.mxu0 0
        %1000 = vmatpush2.bf16.msra.mxu0 0
        %1001 = vmatprep.subr.bf16.mxu0 0
        %1002 = vmatpush2.bf16.msra.mxu0 0
        %1003 = vmatprep.subr.bf16.mxu0 0
        %1004 = vmatpush2.bf16.msra.mxu0 0
        %1005 = vmatprep.subr.bf16.mxu0 0
        %1006 = vmatpush2.bf16.msra.mxu0 0
        %1007 = vmatprep.subr.bf16.mxu0 0
        %1008 = vmatpush2.bf16.msra.mxu0 0
        %1009 = vmatprep.mubr.bf16.mxu0 0
        %1010 = vmatmul.mubr.bf16.gmra.mxu0 %v226
        %v1011 = vpop.f32.mrf.mxu0
        %v1012 = vadd.f32 0.0, %v1011
        %v1013 = vpop.f32.mrf.mxu0
        %v1014 = vadd.f32 0.0, %v1013
        %v1015 = vpop.f32.mrf.mxu0
        %v1016 = vpop.f32.mrf.mxu0
        %1017 = vdwg.mxu0
        %1018 = vmatprep.subr.bf16.mxu0 %v944
        %1019 = vmatpush1.bf16.msra.mxu0 %v943
        %1020 = vmatprep.subr.bf16.mxu0 %v940
        %1021 = vmatpush1.bf16.msra.mxu0 %v939
        %1022 = vmatprep.subr.bf16.mxu0 %v936
        %1023 = vmatpush1.bf16.msra.mxu0 %v935
        %1024 = vmatprep.subr.bf16.mxu0 %v932
        %1025 = vmatpush1.bf16.msra.mxu0 %v931
        %1026 = vmatprep.subr.bf16.mxu0 %v928
        %1027 = vmatpush1.bf16.msra.mxu0 %v927
        %1028 = vmatprep.subr.bf16.mxu0 %v924
        %1029 = vmatpush1.bf16.msra.mxu0 %v923
        %1030 = vmatprep.subr.bf16.mxu0 %v920
        %1031 = vmatpush1.bf16.msra.mxu0 %v919
        %1032 = vmatprep.subr.bf16.mxu0 %v916
        %1033 = vmatpush1.bf16.msra.mxu0 %v915
        %1034 = vmatprep.subr.bf16.mxu0 0
        %1035 = vmatpush2.bf16.msra.mxu0 0
        %1036 = vmatprep.subr.bf16.mxu0 0
        %1037 = vmatpush2.bf16.msra.mxu0 0
        %1038 = vmatprep.subr.bf16.mxu0 0
        %1039 = vmatpush2.bf16.msra.mxu0 0
        %1040 = vmatprep.subr.bf16.mxu0 0
        %1041 = vmatpush2.bf16.msra.mxu0 0
        %1042 = vmatprep.subr.bf16.mxu0 0
        %1043 = vmatpush2.bf16.msra.mxu0 0
        %1044 = vmatprep.subr.bf16.mxu0 0
        %1045 = vmatpush2.bf16.msra.mxu0 0
        %1046 = vmatprep.subr.bf16.mxu0 0
        %1047 = vmatpush2.bf16.msra.mxu0 0
        %1048 = vmatprep.subr.bf16.mxu0 0
        %1049 = vmatpush2.bf16.msra.mxu0 0
        %1050 = vmatprep.mubr.bf16.mxu0 0
        %1051 = vmatmul.mubr.bf16.gmra.mxu0 %v226
        %v1052 = vpop.f32.mrf.mxu0
        %v1053 = vadd.f32 0.0, %v1052
        %v1054 = vpop.f32.mrf.mxu0
        %v1055 = vadd.f32 0.0, %v1054
        %v1056 = vpop.f32.mrf.mxu0
        %v1057 = vpop.f32.mrf.mxu0
        %1058 = vdwg.mxu0
        %v1059 = vmax.f32 %v784, %v1012
        %v1060 = vmax.f32 %v1059, %v1014
        %v1061 = vmax.f32 %v1060, %v1053
        %v1062 = vmax.f32 %v1061, %v1055
        %v1063 = vld [vmem:[#allocation2 + $0x30] sm:$0xff]
        %v1064 = vld [vmem:[#allocation2 + $0x38] sm:$0xff]
        %v1065 = vld [vmem:[#allocation2 + $0x7c] sm:$0xff]
        %v1066 = vld [vmem:[#allocation2 + $0x84] sm:$0xff]
        %v1067 = vld [vmem:[#allocation2 + $0xc8] sm:$0xff]
        %v1068 = vld [vmem:[#allocation2 + $0xd0] sm:$0xff]
        %v1069 = vld [vmem:[#allocation2 + $0x114] sm:$0xff]
        %v1070 = vld [vmem:[#allocation2 + $0x11c] sm:$0xff]
        %v1071 = vld [vmem:[#allocation2 + $0x160] sm:$0xff]
        %v1072 = vld [vmem:[#allocation2 + $0x168] sm:$0xff]
        %v1073 = vld [vmem:[#allocation2 + $0x1ac] sm:$0xff]
        %v1074 = vld [vmem:[#allocation2 + $0x1b4] sm:$0xff]
        %v1075 = vld [vmem:[#allocation2 + $0x1f8] sm:$0xff]
        %v1076 = vld [vmem:[#allocation2 + $0x200] sm:$0xff]
        %v1077 = vld [vmem:[#allocation2 + $0x244] sm:$0xff]
        %v1078 = vld [vmem:[#allocation2 + $0x24c] sm:$0xff]
        %v1079 = vld [vmem:[#allocation2 + $0x290] sm:$0xff]
        %v1080 = vld [vmem:[#allocation2 + $0x298] sm:$0xff]
        %v1081 = vld [vmem:[#allocation2 + $0x2dc] sm:$0xff]
        %v1082 = vld [vmem:[#allocation2 + $0x2e4] sm:$0xff]
        %v1083 = vld [vmem:[#allocation2 + $0x328] sm:$0xff]
        %v1084 = vld [vmem:[#allocation2 + $0x330] sm:$0xff]
        %v1085 = vld [vmem:[#allocation2 + $0x374] sm:$0xff]
        %v1086 = vld [vmem:[#allocation2 + $0x37c] sm:$0xff]
        %v1087 = vld [vmem:[#allocation2 + $0x3c0] sm:$0xff]
        %v1088 = vld [vmem:[#allocation2 + $0x3c8] sm:$0xff]
        %v1089 = vld [vmem:[#allocation2 + $0x40c] sm:$0xff]
        %v1090 = vld [vmem:[#allocation2 + $0x414] sm:$0xff]
        %v1091 = vld [vmem:[#allocation2 + $0x458] sm:$0xff]
        %v1092 = vld [vmem:[#allocation2 + $0x460] sm:$0xff]
        %v1093 = vld [vmem:[#allocation2 + $0x4a4] sm:$0xff]
        %v1094 = vld [vmem:[#allocation2 + $0x4ac] sm:$0xff]
        %v1127 = vunpack.c.l.b16 %v1063
        %v1128 = vunpack.c.h.b16 %v1063
        %v1129 = vunpack.c.l.b16 %v1064
        %v1130 = vunpack.c.h.b16 %v1064
        %v1131 = vunpack.c.l.b16 %v1065
        %v1132 = vunpack.c.h.b16 %v1065
        %v1133 = vunpack.c.l.b16 %v1066
        %v1134 = vunpack.c.h.b16 %v1066
        %v1135 = vunpack.c.l.b16 %v1067
        %v1136 = vunpack.c.h.b16 %v1067
        %v1137 = vunpack.c.l.b16 %v1068
        %v1138 = vunpack.c.h.b16 %v1068
        %v1139 = vunpack.c.l.b16 %v1069
        %v1140 = vunpack.c.h.b16 %v1069
        %v1141 = vunpack.c.l.b16 %v1070
        %v1142 = vunpack.c.h.b16 %v1070
        %v1143 = vunpack.c.l.b16 %v1071
        %v1144 = vunpack.c.h.b16 %v1071
        %v1145 = vunpack.c.l.b16 %v1072
        %v1146 = vunpack.c.h.b16 %v1072
        %v1147 = vunpack.c.l.b16 %v1073
        %v1148 = vunpack.c.h.b16 %v1073
        %v1149 = vunpack.c.l.b16 %v1074
        %v1150 = vunpack.c.h.b16 %v1074
        %v1151 = vunpack.c.l.b16 %v1075
        %v1152 = vunpack.c.h.b16 %v1075
        %v1153 = vunpack.c.l.b16 %v1076
        %v1154 = vunpack.c.h.b16 %v1076
        %v1155 = vunpack.c.l.b16 %v1077
        %v1156 = vunpack.c.h.b16 %v1077
        %v1157 = vunpack.c.l.b16 %v1078
        %v1158 = vunpack.c.h.b16 %v1078
        %v1159 = vunpack.c.l.b16 %v1079
        %v1160 = vunpack.c.h.b16 %v1079
        %v1161 = vunpack.c.l.b16 %v1080
        %v1162 = vunpack.c.h.b16 %v1080
        %v1163 = vunpack.c.l.b16 %v1081
        %v1164 = vunpack.c.h.b16 %v1081
        %v1165 = vunpack.c.l.b16 %v1082
        %v1166 = vunpack.c.h.b16 %v1082
        %v1167 = vunpack.c.l.b16 %v1083
        %v1168 = vunpack.c.h.b16 %v1083
        %v1169 = vunpack.c.l.b16 %v1084
        %v1170 = vunpack.c.h.b16 %v1084
        %v1171 = vunpack.c.l.b16 %v1085
        %v1172 = vunpack.c.h.b16 %v1085
        %v1173 = vunpack.c.l.b16 %v1086
        %v1174 = vunpack.c.h.b16 %v1086
        %v1175 = vunpack.c.l.b16 %v1087
        %v1176 = vunpack.c.h.b16 %v1087
        %v1177 = vunpack.c.l.b16 %v1088
        %v1178 = vunpack.c.h.b16 %v1088
        %v1179 = vunpack.c.l.b16 %v1089
        %v1180 = vunpack.c.h.b16 %v1089
        %v1181 = vunpack.c.l.b16 %v1090
        %v1182 = vunpack.c.h.b16 %v1090
        %v1183 = vunpack.c.l.b16 %v1091
        %v1184 = vunpack.c.h.b16 %v1091
        %v1185 = vunpack.c.l.b16 %v1092
        %v1186 = vunpack.c.h.b16 %v1092
        %v1187 = vunpack.c.l.b16 %v1093
        %v1188 = vunpack.c.h.b16 %v1093
        %v1189 = vunpack.c.l.b16 %v1094
        %v1190 = vunpack.c.h.b16 %v1094
        %v1191 = vpack.c.b16 %v1131, %v1127
        %v1192 = vpack.c.b16 %v1132, %v1128
        %v1193 = vpack.c.b16 %v1133, %v1129
        %v1194 = vpack.c.b16 %v1134, %v1130
        %v1195 = vpack.c.b16 %v1139, %v1135
        %v1196 = vpack.c.b16 %v1140, %v1136
        %v1197 = vpack.c.b16 %v1141, %v1137
        %v1198 = vpack.c.b16 %v1142, %v1138
        %v1199 = vpack.c.b16 %v1147, %v1143
        %v1200 = vpack.c.b16 %v1148, %v1144
        %v1201 = vpack.c.b16 %v1149, %v1145
        %v1202 = vpack.c.b16 %v1150, %v1146
        %v1203 = vpack.c.b16 %v1155, %v1151
        %v1204 = vpack.c.b16 %v1156, %v1152
        %v1205 = vpack.c.b16 %v1157, %v1153
        %v1206 = vpack.c.b16 %v1158, %v1154
        %v1207 = vpack.c.b16 %v1163, %v1159
        %v1208 = vpack.c.b16 %v1164, %v1160
        %v1209 = vpack.c.b16 %v1165, %v1161
        %v1210 = vpack.c.b16 %v1166, %v1162
        %v1211 = vpack.c.b16 %v1171, %v1167
        %v1212 = vpack.c.b16 %v1172, %v1168
        %v1213 = vpack.c.b16 %v1173, %v1169
        %v1214 = vpack.c.b16 %v1174, %v1170
        %v1215 = vpack.c.b16 %v1179, %v1175
        %v1216 = vpack.c.b16 %v1180, %v1176
        %v1217 = vpack.c.b16 %v1181, %v1177
        %v1218 = vpack.c.b16 %v1182, %v1178
        %v1219 = vpack.c.b16 %v1187, %v1183
        %v1220 = vpack.c.b16 %v1188, %v1184
        %v1221 = vpack.c.b16 %v1189, %v1185
        %v1222 = vpack.c.b16 %v1190, %v1186
        %1255 = vmatprep.subr.bf16.mxu0 %v1220
        %1256 = vmatpush1.bf16.msra.mxu0 %v1219
        %1257 = vmatprep.subr.bf16.mxu0 %v1216
        %1258 = vmatpush1.bf16.msra.mxu0 %v1215
        %1259 = vmatprep.subr.bf16.mxu0 %v1212
        %1260 = vmatpush1.bf16.msra.mxu0 %v1211
        %1261 = vmatprep.subr.bf16.mxu0 %v1208
        %1262 = vmatpush1.bf16.msra.mxu0 %v1207
        %1263 = vmatprep.subr.bf16.mxu0 %v1204
        %1264 = vmatpush1.bf16.msra.mxu0 %v1203
        %1265 = vmatprep.subr.bf16.mxu0 %v1200
        %1266 = vmatpush1.bf16.msra.mxu0 %v1199
        %1267 = vmatprep.subr.bf16.mxu0 %v1196
        %1268 = vmatpush1.bf16.msra.mxu0 %v1195
        %1269 = vmatprep.subr.bf16.mxu0 %v1192
        %1270 = vmatpush1.bf16.msra.mxu0 %v1191
        %1271 = vmatprep.subr.bf16.mxu0 0
        %1272 = vmatpush2.bf16.msra.mxu0 0
        %1273 = vmatprep.subr.bf16.mxu0 0
        %1274 = vmatpush2.bf16.msra.mxu0 0
        %1275 = vmatprep.subr.bf16.mxu0 0
        %1276 = vmatpush2.bf16.msra.mxu0 0
        %1277 = vmatprep.subr.bf16.mxu0 0
        %1278 = vmatpush2.bf16.msra.mxu0 0
        %1279 = vmatprep.subr.bf16.mxu0 0
        %1280 = vmatpush2.bf16.msra.mxu0 0
        %1281 = vmatprep.subr.bf16.mxu0 0
        %1282 = vmatpush2.bf16.msra.mxu0 0
        %1283 = vmatprep.subr.bf16.mxu0 0
        %1284 = vmatpush2.bf16.msra.mxu0 0
        %1285 = vmatprep.subr.bf16.mxu0 0
        %1286 = vmatpush2.bf16.msra.mxu0 0
        %1287 = vmatprep.mubr.bf16.mxu0 0
        %1288 = vmatmul.mubr.bf16.gmra.mxu0 %v226
        %v1289 = vpop.f32.mrf.mxu0
        %v1290 = vadd.f32 0.0, %v1289
        %v1291 = vpop.f32.mrf.mxu0
        %v1292 = vadd.f32 0.0, %v1291
        %v1293 = vpop.f32.mrf.mxu0
        %v1294 = vpop.f32.mrf.mxu0
        %1295 = vdwg.mxu0
        %1296 = vmatprep.subr.bf16.mxu0 %v1222
        %1297 = vmatpush1.bf16.msra.mxu0 %v1221
        %1298 = vmatprep.subr.bf16.mxu0 %v1218
        %1299 = vmatpush1.bf16.msra.mxu0 %v1217
        %1300 = vmatprep.subr.bf16.mxu0 %v1214
        %1301 = vmatpush1.bf16.msra.mxu0 %v1213
        %1302 = vmatprep.subr.bf16.mxu0 %v1210
        %1303 = vmatpush1.bf16.msra.mxu0 %v1209
        %1304 = vmatprep.subr.bf16.mxu0 %v1206
        %1305 = vmatpush1.bf16.msra.mxu0 %v1205
        %1306 = vmatprep.subr.bf16.mxu0 %v1202
        %1307 = vmatpush1.bf16.msra.mxu0 %v1201
        %1308 = vmatprep.subr.bf16.mxu0 %v1198
        %1309 = vmatpush1.bf16.msra.mxu0 %v1197
        %1310 = vmatprep.subr.bf16.mxu0 %v1194
        %1311 = vmatpush1.bf16.msra.mxu0 %v1193
        %1312 = vmatprep.subr.bf16.mxu0 0
        %1313 = vmatpush2.bf16.msra.mxu0 0
        %1314 = vmatprep.subr.bf16.mxu0 0
        %1315 = vmatpush2.bf16.msra.mxu0 0
        %1316 = vmatprep.subr.bf16.mxu0 0
        %1317 = vmatpush2.bf16.msra.mxu0 0
        %1318 = vmatprep.subr.bf16.mxu0 0
        %1319 = vmatpush2.bf16.msra.mxu0 0
        %1320 = vmatprep.subr.bf16.mxu0 0
        %1321 = vmatpush2.bf16.msra.mxu0 0
        %1322 = vmatprep.subr.bf16.mxu0 0
        %1323 = vmatpush2.bf16.msra.mxu0 0
        %1324 = vmatprep.subr.bf16.mxu0 0
        %1325 = vmatpush2.bf16.msra.mxu0 0
        %1326 = vmatprep.subr.bf16.mxu0 0
        %1327 = vmatpush2.bf16.msra.mxu0 0
        %1328 = vmatprep.mubr.bf16.mxu0 0
        %1329 = vmatmul.mubr.bf16.gmra.mxu0 %v226
        %v1330 = vpop.f32.mrf.mxu0
        %v1331 = vadd.f32 0.0, %v1330
        %v1332 = vpop.f32.mrf.mxu0
        %v1333 = vadd.f32 0.0, %v1332
        %v1334 = vpop.f32.mrf.mxu0
        %v1335 = vpop.f32.mrf.mxu0
        %1336 = vdwg.mxu0
        %v1337 = vmax.f32 %v1062, %v1290
        %v1338 = vmax.f32 %v1337, %v1292
        %vm1339 = vcmp.ge.s32.totalorder %v228, 16
        %vm1340 = vcmp.lt.s32.totalorder %v228, 32
        %vm1341 = vmand %vm1339, %vm1340
        %v1342 = vsel %vm1341, 1, 0
        %vm1343 = vcmp.eq.s32.totalorder %v1342, 1
        %v1344 = vsel %vm1343, -3e+38, %v1331
        %v1345 = vmax.f32 %v1338, %v1344
        %vm1346 = vcmp.ge.s32.totalorder %v228, 8
        %vm1347 = vmand %vm1346, %vm1340
        %v1348 = vsel %vm1347, 1, 0
        %vm1349 = vcmp.eq.s32.totalorder %v1348, 1
        %v1350 = vsel %vm1349, -3e+38, %v1333
        %v1351 = vmax.f32 %v1345, %v1350
        %v1352 = vld [vmem:[%s3] sm:$0x1]
        %v1354 = vlaneseq
        %v1355 = vshrl.u32 %v1354, 7
        %v1356 = vsub.s32 0, %v1355
        %v1357 = vrot.slane %v1352, %v1356
        %v1359 = vadd.f32 %v1351, %v1357
        %v1360 = vmax.f32 %v1359, 0.0
        %v1361 = vsel %vm1340, 1, 0
        %vm1362 = vcmp.eq.s32.totalorder %v1361, 1
        %v1363 = vsel %vm1362, %v1360, 0.0
        %v1364 = vpack.c.bf16 %v1363, %v1363
        %v1365 = vld [vmem:[#allocation2 + $0x40] sm:$0xff]
        %v1366 = vld [vmem:[#allocation2 + $0x8c] sm:$0xff]
        %v1367 = vld [vmem:[#allocation2 + $0xd8] sm:$0xff]
        %v1368 = vld [vmem:[#allocation2 + $0x124] sm:$0xff]
        %v1369 = vld [vmem:[#allocation2 + $0x170] sm:$0xff]
        %v1370 = vld [vmem:[#allocation2 + $0x1bc] sm:$0xff]
        %v1371 = vld [vmem:[#allocation2 + $0x208] sm:$0xff]
        %v1372 = vld [vmem:[#allocation2 + $0x254] sm:$0xff]
        %v1373 = vld [vmem:[#allocation2 + $0x2a0] sm:$0xff]
        %v1374 = vld [vmem:[#allocation2 + $0x2ec] sm:$0xff]
        %v1375 = vld [vmem:[#allocation2 + $0x338] sm:$0xff]
        %v1376 = vld [vmem:[#allocation2 + $0x384] sm:$0xff]
        %v1377 = vld [vmem:[#allocation2 + $0x3d0] sm:$0xff]
        %v1378 = vld [vmem:[#allocation2 + $0x41c] sm:$0xff]
        %v1379 = vld [vmem:[#allocation2 + $0x468] sm:$0xff]
        %v1380 = vld [vmem:[#allocation2 + $0x4b4] sm:$0xff]
        %v1381 = vld [vmem:[%s3 + $0x1] sm:$0x3]
        %v1383 = vlaneseq
        %v1384 = vshrl.u32 %v1383, 7
        %v1385 = vsub.s32 0, %v1384
        %v1386 = vrot.slane %v1381, %v1385
        %v1387 = vlaneseq
        %v1388 = vshrl.u32 %v1387, 7
        %v1389 = vsub.s32 1, %v1388
        %v1390 = vrot.slane %v1381, %v1389
        %v1409 = vunpack.c.l.b16 %v1365
        %v1410 = vunpack.c.h.b16 %v1365
        %v1411 = vunpack.c.l.b16 %v1366
        %v1412 = vunpack.c.h.b16 %v1366
        %v1413 = vunpack.c.l.b16 %v1367
        %v1414 = vunpack.c.h.b16 %v1367
        %v1415 = vunpack.c.l.b16 %v1368
        %v1416 = vunpack.c.h.b16 %v1368
        %v1417 = vunpack.c.l.b16 %v1369
        %v1418 = vunpack.c.h.b16 %v1369
        %v1419 = vunpack.c.l.b16 %v1370
        %v1420 = vunpack.c.h.b16 %v1370
        %v1421 = vunpack.c.l.b16 %v1371
        %v1422 = vunpack.c.h.b16 %v1371
        %v1423 = vunpack.c.l.b16 %v1372
        %v1424 = vunpack.c.h.b16 %v1372
        %v1425 = vunpack.c.l.b16 %v1373
        %v1426 = vunpack.c.h.b16 %v1373
        %v1427 = vunpack.c.l.b16 %v1374
        %v1428 = vunpack.c.h.b16 %v1374
        %v1429 = vunpack.c.l.b16 %v1375
        %v1430 = vunpack.c.h.b16 %v1375
        %v1431 = vunpack.c.l.b16 %v1376
        %v1432 = vunpack.c.h.b16 %v1376
        %v1433 = vunpack.c.l.b16 %v1377
        %v1434 = vunpack.c.h.b16 %v1377
        %v1435 = vunpack.c.l.b16 %v1378
        %v1436 = vunpack.c.h.b16 %v1378
        %v1437 = vunpack.c.l.b16 %v1379
        %v1438 = vunpack.c.h.b16 %v1379
        %v1439 = vunpack.c.l.b16 %v1380
        %v1440 = vunpack.c.h.b16 %v1380
        %v1441 = vpack.c.b16 %v1411, %v1409
        %v1442 = vpack.c.b16 %v1412, %v1410
        %v1443 = vpack.c.b16 %v1415, %v1413
        %v1444 = vpack.c.b16 %v1416, %v1414
        %v1445 = vpack.c.b16 %v1419, %v1417
        %v1446 = vpack.c.b16 %v1420, %v1418
        %v1447 = vpack.c.b16 %v1423, %v1421
        %v1448 = vpack.c.b16 %v1424, %v1422
        %v1449 = vpack.c.b16 %v1427, %v1425
        %v1450 = vpack.c.b16 %v1428, %v1426
        %v1451 = vpack.c.b16 %v1431, %v1429
        %v1452 = vpack.c.b16 %v1432, %v1430
        %v1453 = vpack.c.b16 %v1435, %v1433
        %v1454 = vpack.c.b16 %v1436, %v1434
        %v1455 = vpack.c.b16 %v1439, %v1437
        %v1456 = vpack.c.b16 %v1440, %v1438
        %1473 = vmatprep.subr.bf16.mxu0 %v1456
        %1474 = vmatpush1.bf16.msra.mxu0 %v1455
        %1475 = vmatprep.subr.bf16.mxu0 %v1454
        %1476 = vmatpush1.bf16.msra.mxu0 %v1453
        %1477 = vmatprep.subr.bf16.mxu0 %v1452
        %1478 = vmatpush1.bf16.msra.mxu0 %v1451
        %1479 = vmatprep.subr.bf16.mxu0 %v1450
        %1480 = vmatpush1.bf16.msra.mxu0 %v1449
        %1481 = vmatprep.subr.bf16.mxu0 %v1448
        %1482 = vmatpush1.bf16.msra.mxu0 %v1447
        %1483 = vmatprep.subr.bf16.mxu0 %v1446
        %1484 = vmatpush1.bf16.msra.mxu0 %v1445
        %1485 = vmatprep.subr.bf16.mxu0 %v1444
        %1486 = vmatpush1.bf16.msra.mxu0 %v1443
        %1487 = vmatprep.subr.bf16.mxu0 %v1442
        %1488 = vmatpush1.bf16.msra.mxu0 %v1441
        %1489 = vmatprep.subr.bf16.mxu0 0
        %1490 = vmatpush2.bf16.msra.mxu0 0
        %1491 = vmatprep.subr.bf16.mxu0 0
        %1492 = vmatpush2.bf16.msra.mxu0 0
        %1493 = vmatprep.subr.bf16.mxu0 0
        %1494 = vmatpush2.bf16.msra.mxu0 0
        %1495 = vmatprep.subr.bf16.mxu0 0
        %1496 = vmatpush2.bf16.msra.mxu0 0
        %1497 = vmatprep.subr.bf16.mxu0 0
        %1498 = vmatpush2.bf16.msra.mxu0 0
        %1499 = vmatprep.subr.bf16.mxu0 0
        %1500 = vmatpush2.bf16.msra.mxu0 0
        %1501 = vmatprep.subr.bf16.mxu0 0
        %1502 = vmatpush2.bf16.msra.mxu0 0
        %1503 = vmatprep.subr.bf16.mxu0 0
        %1504 = vmatpush2.bf16.msra.mxu0 0
        %1505 = vmatprep.mubr.bf16.mxu0 0
        %1506 = vmatmul.mubr.bf16.gmra.mxu0 %v1364
        %v1507 = vpop.f32.mrf.mxu0
        %v1508 = vadd.f32 %v1386, %v1507
        %v1509 = vpop.f32.mrf.mxu0
        %v1510 = vadd.f32 %v1390, %v1509
        %v1511 = vpop.f32.mrf.mxu0
        %v1512 = vpop.f32.mrf.mxu0
        %1513 = vdwg.mxu0
        %v1514 = vmax.f32 %v1508, 0.0
        %v1515 = vxor.u32 %v1510, 2147483648
        %v1516 = vmul.f32 %v1515, 1.442695
        %v1517 = vpow.pop %v1516
        %v1518 = vadd.f32 %v1517, 1.0
        %v1519 = vrcp.pop %v1518
        %v1520 = vmul.f32 1.0, %v1519
        %v1521 = vmul.f32 %v1520, %v1363
        %v1522 = vsub.f32 1.0, %v1520
        %v1523 = vmul.f32 %v1522, %v1514
        %v1524 = vadd.f32 %v1521, %v1523
        %v1525 = vpack.c.bf16 %v1524, %v1524
        %v1526 = vld [vmem:[%s224] sm:$0xf]
        %v1527 = vadd.bf16 %v1525, %v1526
        %v1528 = vld [vmem:[#allocation2 + $0x48] sm:$0xf]
        %v1529 = vld [vmem:[#allocation2 + $0x94] sm:$0xf]
        %v1530 = vld [vmem:[#allocation2 + $0xe0] sm:$0xf]
        %v1531 = vld [vmem:[#allocation2 + $0x12c] sm:$0xf]
        %v1532 = vld [vmem:[#allocation2 + $0x178] sm:$0xf]
        %v1533 = vld [vmem:[#allocation2 + $0x1c4] sm:$0xf]
        %v1534 = vld [vmem:[#allocation2 + $0x210] sm:$0xf]
        %v1535 = vld [vmem:[#allocation2 + $0x25c] sm:$0xf]
        %v1536 = vld [vmem:[#allocation2 + $0x2a8] sm:$0xf]
        %v1537 = vld [vmem:[#allocation2 + $0x2f4] sm:$0xf]
        %v1538 = vld [vmem:[#allocation2 + $0x340] sm:$0xf]
        %v1539 = vld [vmem:[#allocation2 + $0x38c] sm:$0xf]
        %v1540 = vld [vmem:[#allocation2 + $0x3d8] sm:$0xf]
        %v1541 = vld [vmem:[#allocation2 + $0x424] sm:$0xf]
        %v1542 = vld [vmem:[#allocation2 + $0x470] sm:$0xf]
        %v1543 = vld [vmem:[#allocation2 + $0x4bc] sm:$0xf]
        %v1544 = vld [vmem:[%s3 + $0x3] sm:$0x1]
        %v1546 = vlaneseq
        %v1547 = vshrl.u32 %v1546, 7
        %v1548 = vsub.s32 0, %v1547
        %v1549 = vrot.slane %v1544, %v1548
        %v1567 = vunpack.c.l.b16 %v1528
        %v1568 = vunpack.c.l.b16 %v1529
        %v1569 = vunpack.c.l.b16 %v1530
        %v1570 = vunpack.c.l.b16 %v1531
        %v1571 = vunpack.c.l.b16 %v1532
        %v1572 = vunpack.c.l.b16 %v1533
        %v1573 = vunpack.c.l.b16 %v1534
        %v1574 = vunpack.c.l.b16 %v1535
        %v1575 = vunpack.c.l.b16 %v1536
        %v1576 = vunpack.c.l.b16 %v1537
        %v1577 = vunpack.c.l.b16 %v1538
        %v1578 = vunpack.c.l.b16 %v1539
        %v1579 = vunpack.c.l.b16 %v1540
        %v1580 = vunpack.c.l.b16 %v1541
        %v1581 = vunpack.c.l.b16 %v1542
        %v1582 = vunpack.c.l.b16 %v1543
        %v1583 = vpack.c.b16 %v1568, %v1567
        %v1584 = vpack.c.b16 %v1570, %v1569
        %v1585 = vpack.c.b16 %v1572, %v1571
        %v1586 = vpack.c.b16 %v1574, %v1573
        %v1587 = vpack.c.b16 %v1576, %v1575
        %v1588 = vpack.c.b16 %v1578, %v1577
        %v1589 = vpack.c.b16 %v1580, %v1579
        %v1590 = vpack.c.b16 %v1582, %v1581
        %1599 = vmatprep.subr.bf16.mxu0 0
        %1600 = vmatpush1.bf16.msra.mxu0 %v1590
        %1601 = vmatprep.subr.bf16.mxu0 0
        %1602 = vmatpush1.bf16.msra.mxu0 %v1589
        %1603 = vmatprep.subr.bf16.mxu0 0
        %1604 = vmatpush1.bf16.msra.mxu0 %v1588
        %1605 = vmatprep.subr.bf16.mxu0 0
        %1606 = vmatpush1.bf16.msra.mxu0 %v1587
        %1607 = vmatprep.subr.bf16.mxu0 0
        %1608 = vmatpush1.bf16.msra.mxu0 %v1586
        %1609 = vmatprep.subr.bf16.mxu0 0
        %1610 = vmatpush1.bf16.msra.mxu0 %v1585
        %1611 = vmatprep.subr.bf16.mxu0 0
        %1612 = vmatpush1.bf16.msra.mxu0 %v1584
        %1613 = vmatprep.subr.bf16.mxu0 0
        %1614 = vmatpush1.bf16.msra.mxu0 %v1583
        %1615 = vmatprep.subr.bf16.mxu0 0
        %1616 = vmatpush2.bf16.msra.mxu0 0
        %1617 = vmatprep.subr.bf16.mxu0 0
        %1618 = vmatpush2.bf16.msra.mxu0 0
        %1619 = vmatprep.subr.bf16.mxu0 0
        %1620 = vmatpush2.bf16.msra.mxu0 0
        %1621 = vmatprep.subr.bf16.mxu0 0
        %1622 = vmatpush2.bf16.msra.mxu0 0
        %1623 = vmatprep.subr.bf16.mxu0 0
        %1624 = vmatpush2.bf16.msra.mxu0 0
        %1625 = vmatprep.subr.bf16.mxu0 0
        %1626 = vmatpush2.bf16.msra.mxu0 0
        %1627 = vmatprep.subr.bf16.mxu0 0
        %1628 = vmatpush2.bf16.msra.mxu0 0
        %1629 = vmatprep.subr.bf16.mxu0 0
        %1630 = vmatpush2.bf16.msra.mxu0 0
        %1631 = vmatprep.mubr.bf16.mxu0 0
        %1632 = vmatmul.mubr.bf16.gmra.mxu0 %v1527
        %v1633 = vpop.f32.mrf.mxu0
        %v1634 = vadd.f32 %v1549, %v1633
        %v1635 = vpop.f32.mrf.mxu0
        %v1636 = vpop.f32.mrf.mxu0
        %v1637 = vpop.f32.mrf.mxu0
        %1638 = vdwg.mxu0
        %vm1639 = vcmask 261120
        %1640 = vst.msk [vmem:[%s216] sm:$0xff] %vm1639, %v1634
        %s1641 = sand.u32 %s121, 1
        %s1642 = scalar_lea.sflag [#allocation4], %s1641
        %s1643 = sand.u32 %s121, 1
        %s1644 = smul.addr %s1643, 8
        %s1645 = scalar_lea.vmem [#allocation5], %s1644
        // Predicated region
        $region41: #{conv_token_embedder.1} parent=35 // pred_check
          %p1646 = pneg %p131
        $region42: #{conv_token_embedder.1} parent=35 // pred_check_branch
          %1648 = sbr.rel (%p1646) target = $region44
        $region43: #{conv_token_embedder.1} parent=35 // pred_region
          %s1650 = ssub.s32 128, 128
          %1651 = vsyncadd %s1642, %s1650
          %s1652 = smul.addr %s19, 128
          %s1653 = scalar_lea.hbm %s4, %s1652
          %s1655 = sshll.u32 %s1645, 4
          %s1656 = int_to_ptr.vmem [resolvable:$true] %s1655
          %1658 = dma.vmem_to_hbm [thread:$0]  %s1656, 128, %s1653, %s1642
        $region44: #{conv_token_embedder.1} parent=35 // pred_fallthru
          _
      $region36: #{conv_token_embedder.1} parent=5 // pred_fallthru
        _
      %p1659 = scmp.le.s32.totalorder 2, %s14
      // Predicated region
      $region45: #{conv_token_embedder.1} parent=5 // pred_check
        %p1660 = pneg %p1659
      $region46: #{conv_token_embedder.1} parent=5 // pred_check_branch
        %1662 = sbr.rel (%p1660) target = $region48
      $region47: #{conv_token_embedder.1} parent=5 // pred_region
        %s1663 = ssub.s32 %s14, 2
        // Predicated region
        $region49: #{conv_token_embedder.1} parent=47 // pred_check
          %p1664 = pneg %p137
        $region50: #{conv_token_embedder.1} parent=47 // pred_check_branch
          %1666 = sbr.rel (%p1664) target = $region52
        $region51: #{conv_token_embedder.1} parent=47 // pred_region
          %s1667 = sand.u32 %s122, 1
          %s1668 = scalar_lea.sflag [#allocation4], %s1667
          %s1669 = sand.u32 %s122, 1
          %s1670 = smul.addr %s1669, 8
          %s1671 = scalar_lea.vmem [#allocation5], %s1670
          %1672 = dma.done %s1668, 128
        $region52: #{conv_token_embedder.1} parent=47 // pred_fallthru
          _
      $region48: #{conv_token_embedder.1} parent=5 // pred_fallthru
        _
    $region6: #{conv_token_embedder.1} parent=1 // loop_footer
      %s18 = sadd.s32 1, %s14
    $region7: #{conv_token_embedder.1} parent=1 // loop_footer_branch
      %13 = sbr.rel target = $region3
    $region8: #{conv_token_embedder.1} parent=1 // loop_exit
      _
    %1673 = vsyncpa [#allocation3], 1
    %s1674 = scalar_lea.sflag [#allocation3], 1
    %1675 = vsyncpa %s1674, 1
    %1676 = vsyncpa [#allocation4], 1
    %s1677 = scalar_lea.sflag [#allocation4], 1
    %1678 = vsyncpa %s1677, 1

</llo_original>
